<compile_context>
chip_gen: v6e
topology: v6e:2x2x1
jax: 0.10.0
libtpu: 0.0.40
codegen_flags: <defaults>
</compile_context>

<pallas_src>
import jax
import jax.numpy as jnp
from jax.experimental import pallas as pl
from jax.experimental.pallas import tpu as pltpu

BN_EPS = 1e-5
CLIP_DIM = 512
ENC_HIDDEN = 256
SHARED_DIM = 128
SIM_DIM = 64
PRED_DIM = 2
PRED_PAD = 128                    # lane-dense width for the prediction half of the output slab
OUT_W = 2 * SIM_DIM + PRED_PAD    # 256: [text_aligned | image_aligned | pred (zero-padded)]


def _round_up(x, m):
    return (x + m - 1) // m * m


def _bf16(x):
    return x.astype(jnp.bfloat16)


# ------------------------------ shared math (kernel == reference) ----------------------

def _dense_relu(x, w, b):
    y = jnp.dot(_bf16(x), w, preferred_element_type=jnp.float32)
    return jnp.maximum(y + b, 0.0)


def _fused_math(text, image, w, bias):
    """v6e/v7x variant: encoder-2 / aligner-1 / aligner-2 fused across modalities."""
    te_w1, ie_w1, e2_wt, e2_wi, a1_w, a2_w, c1_w, c2_w = w
    t = _dense_relu(text, te_w1, bias("te1"))                 # (tm, 256)
    i = _dense_relu(image, ie_w1, bias("ie1"))                 # (tm, 256)
    enc = (jnp.dot(_bf16(t), e2_wt, preferred_element_type=jnp.float32)
           + jnp.dot(_bf16(i), e2_wi, preferred_element_type=jnp.float32))
    enc = jnp.maximum(enc + bias("e2"), 0.0)                   # (tm, 256) = [text_enc | image_enc]
    al1 = _dense_relu(enc, a1_w, bias("a1"))                   # block-diag  -> (tm, 256)
    slab = _dense_relu(al1, a2_w, bias("a2"))                  # block-diag  -> (tm, 128)
    h = _dense_relu(slab, c1_w, bias("c1"))                    # (tm, 64)
    pred = jnp.dot(_bf16(h), c2_w, preferred_element_type=jnp.float32) + bias("c2")
    return slab, pred


def _unfused_math(text, image, w, bias):
    """v5e (128-wide MXU) variant: per-modality 128x128 matmuls."""
    te_w1, te_w2, ie_w1, ie_w2, ta_w1, ia_w1, al2_wt, al2_wi, c1_w, c2_w = w
    t = _dense_relu(text, te_w1, bias("te1"))
    t = _dense_relu(t, te_w2, bias("te2"))
    i = _dense_relu(image, ie_w1, bias("ie1"))
    i = _dense_relu(i, ie_w2, bias("ie2"))
    t = _dense_relu(t, ta_w1, bias("ta1"))
    i = _dense_relu(i, ia_w1, bias("ia1"))
    slab = (jnp.dot(_bf16(t), al2_wt, preferred_element_type=jnp.float32)
            + jnp.dot(_bf16(i), al2_wi, preferred_element_type=jnp.float32))
    slab = jnp.maximum(slab + bias("slab"), 0.0)               # (tm, 128)
    h = _dense_relu(slab, c1_w, bias("c1"))
    pred = jnp.dot(_bf16(h), c2_w, preferred_element_type=jnp.float32) + bias("c2")
    return slab, pred


# ---------------------------------- kernel --------------------------------------------

def _make_kernel(fused, bias_offsets, n_weights):
    math_fn = _fused_math if fused else _unfused_math

    def kernel(*refs):
        text_ref, image_ref = refs[0], refs[1]
        w_refs = refs[2:2 + n_weights]
        bias_ref = refs[2 + n_weights]
        out_ref = refs[3 + n_weights]

        def bias(name):
            off, dim = bias_offsets[name]
            return bias_ref[:, off:off + dim]        # static, 128-lane-aligned slice

        w = tuple(r[...] for r in w_refs)
        slab, pred = math_fn(text_ref[...], image_ref[...], w, bias)

        # One lane-dense (tm, 256) bf16 output slab; both halves 128-lane aligned.
        out_ref[:, :2 * SIM_DIM] = slab.astype(out_ref.dtype)
        out_ref[:, 2 * SIM_DIM:] = pred.astype(out_ref.dtype)

    return kernel


# ------------------------------ device / tiling selection -----------------------------

def _device_kind():
    try:
        return jax.devices()[0].device_kind.lower()
    except Exception:
        return ""


def default_fuse_aligners():
    # 256-wide MXU generations (v6e / v7x): block-diagonal fusion wins.
    # 128-wide MXU generations (v5e and older): keep per-modality 128x128 matmuls.
    k = _device_kind()
    return ("v6" in k) or ("v7" in k)


def _num_tensorcores():
    return 2 if "v7" in _device_kind() else 1


def _choose_tiling(batch, block_rows, num_cores):
    b16 = _round_up(max(batch, 1), 16)                       # bf16 stores need 16-row tiles
    cap = max(16, _round_up(min(block_rows, b16), 16))
    n = pl.cdiv(b16, cap)
    # v7x: make sure both TensorCores get work when the batch allows two >=256-row tiles.
    if num_cores > 1 and n < num_cores and b16 >= num_cores * 256:
        n = num_cores
    tm = _round_up(pl.cdiv(b16, n), 16)                      # minimize pad rows
    return tm, n * tm, n


# ---------------------------------- wrapper -------------------------------------------

def similarity_forward(text, image, params, *, block_rows=512):
    """Fused SimilarityModule forward.

    params: dict from fold_params() (bf16 weights + packed f32 biases + layout metadata).
    block_rows: max batch tile; 512 reaches ~85% of HBM roofline per measured Pallas data.
    """
    B = text.shape[0]
    weights = params["weights"]
    bias_packed = params["bias"]
    offsets = params["offsets"]
    fused = params["fused"]

    tm, b_pad, n_tiles = _choose_tiling(B, block_rows, _num_tensorcores())
    if b_pad != B:
        pad = ((0, b_pad - B), (0, 0))
        text = jnp.pad(text, pad)
        image = jnp.pad(image, pad)

    # Inputs keep the producer dtype (e.g. f32); bf16 cast happens on the VPU inside the
    # kernel, avoiding a separate HBM read+write pass in the wrapper.
    act_spec = pl.BlockSpec((tm, CLIP_DIM), lambda i: (i, 0))
    in_specs = (
        [act_spec, act_spec]
        + [pl.BlockSpec(w.shape, lambda i: (0, 0)) for w in weights]   # VMEM-resident
        + [pl.BlockSpec(bias_packed.shape, lambda i: (0, 0))]
    )
    out_specs = pl.BlockSpec((tm, OUT_W), lambda i: (i, 0))
    out_shape = jax.ShapeDtypeStruct((b_pad, OUT_W), jnp.bfloat16)

    # Scoped-VMEM estimate: double-buffered activations/output + weights (double-buffered worst case).
    itemsize = jnp.dtype(text.dtype).itemsize
    est = (2 * 2 * tm * CLIP_DIM * itemsize
           + 2 * tm * OUT_W * 2
           + 2 * sum(int(w.size) * 2 for w in weights)
           + 2 * int(bias_packed.size) * 4)
    vmem_limit = None
    if est > 28 * (1 << 20):
        vmem_limit = min(int(est * 1.25), 60 * (1 << 20))    # stays under v7x's 64 MiB physical

    kernel = _make_kernel(fused, offsets, len(weights))
    out = pl.pallas_call(
        kernel,
        grid=(n_tiles,),
        in_specs=in_specs,
        out_specs=out_specs,
        out_shape=out_shape,
        compiler_params=pltpu.CompilerParams(
            dimension_semantics=("parallel",),
            vmem_limit_bytes=vmem_limit),
    )(text, image, *weights, bias_packed)

    text_aligned = out[:B, :SIM_DIM].astype(jnp.float32)
    image_aligned = out[:B, SIM_DIM:2 * SIM_DIM].astype(jnp.float32)
    pred = out[:B, 2 * SIM_DIM:2 * SIM_DIM + PRED_DIM].astype(jnp.float32)
    return text_aligned, image_aligned, pred


# --------------------- parameter construction & BN folding (plain JAX) ----------------

def _init_linear(key, din, dout):
    kw, kb = jax.random.split(key)
    w = jax.random.normal(kw, (din, dout), jnp.float32) / jnp.sqrt(din)
    b = 0.02 * jax.random.normal(kb, (1, dout), jnp.float32)
    return {"w": w, "b": b}


def _init_bn(key, dim):
    kg, kb, km, kv = jax.random.split(key, 4)
    return {"gamma": jax.random.uniform(kg, (dim,), jnp.float32, 0.8, 1.2),
            "beta": 0.1 * jax.random.normal(kb, (dim,), jnp.float32),
            "mean": 0.1 * jax.random.normal(km, (dim,), jnp.float32),
            "var": jax.random.uniform(kv, (dim,), jnp.float32, 0.5, 1.5)}


def init_raw_params(key):
    ks = jax.random.split(key, 12)

    def lin_bn(k, din, dout):
        k1, k2 = jax.random.split(k)
        return {"lin": _init_linear(k1, din, dout), "bn": _init_bn(k2, dout)}

    return {
        "text_enc1": lin_bn(ks[0], CLIP_DIM, ENC_HIDDEN),
        "text_enc2": lin_bn(ks[1], ENC_HIDDEN, SHARED_DIM),
        "image_enc1": lin_bn(ks[2], CLIP_DIM, ENC_HIDDEN),
        "image_enc2": lin_bn(ks[3], ENC_HIDDEN, SHARED_DIM),
        "text_al1": lin_bn(ks[4], SHARED_DIM, SHARED_DIM),
        "text_al2": lin_bn(ks[5], SHARED_DIM, SIM_DIM),
        "image_al1": lin_bn(ks[6], SHARED_DIM, SHARED_DIM),
        "image_al2": lin_bn(ks[7], SHARED_DIM, SIM_DIM),
        "cls_bn0": _init_bn(ks[8], 2 * SIM_DIM),
        "cls_lin1": _init_linear(ks[9], 2 * SIM_DIM, 64),
        "cls_bn1": _init_bn(ks[10], 64),
        "cls_lin2": _init_linear(ks[11], 64, PRED_DIM),
    }


def _pack_biases(named_vecs):
    """Pack all bias vectors into one lane-aligned f32 row (every slot 128-lane aligned)."""
    offsets, off = {}, 0
    for name, vec in named_vecs:
        offsets[name] = (off, int(vec.shape[0]))
        off += _round_up(int(vec.shape[0]), 128)
    packed = jnp.zeros((1, off), jnp.float32)
    for name, vec in named_vecs:
        o, d = offsets[name]
        packed = packed.at[0, o:o + d].set(vec)
    return packed, offsets


def fold_params(raw, fused=None):
    """Fold eval-mode BatchNorm1d into adjacent Linears; build the kernel weight layout."""
    if fused is None:
        fused = default_fuse_aligners()

    def fold(entry):
        lin, bn = entry["lin"], entry["bn"]
        s = bn["gamma"] / jnp.sqrt(bn["var"] + BN_EPS)
        t = bn["beta"] - bn["mean"] * s
        return lin["w"] * s[None, :], lin["b"][0] * s + t

    te_w1, te_b1 = fold(raw["text_enc1"])
    te_w2, te_b2 = fold(raw["text_enc2"])
    ie_w1, ie_b1 = fold(raw["image_enc1"])
    ie_w2, ie_b2 = fold(raw["image_enc2"])
    ta_w1, ta_b1 = fold(raw["text_al1"])
    ta_w2, ta_b2 = fold(raw["text_al2"])
    ia_w1, ia_b1 = fold(raw["image_al1"])
    ia_w2, ia_b2 = fold(raw["image_al2"])

    # Classifier: fold BN(128) before Linear(128, 64) and BN(64) after it.
    bn0, bn1 = raw["cls_bn0"], raw["cls_bn1"]
    s0 = bn0["gamma"] / jnp.sqrt(bn0["var"] + BN_EPS)
    t0 = bn0["beta"] - bn0["mean"] * s0
    s1 = bn1["gamma"] / jnp.sqrt(bn1["var"] + BN_EPS)
    t1 = bn1["beta"] - bn1["mean"] * s1
    w1 = raw["cls_lin1"]["w"]
    b1 = raw["cls_lin1"]["b"][0]
    c1_w = (s0[:, None] * w1) * s1[None, :]
    c1_b = (t0 @ w1 + b1) * s1 + t1

    # Final 64 -> 2 linear, zero-padded to 128 output lanes (sliced outside the kernel).
    w2 = raw["cls_lin2"]["w"]
    b2 = raw["cls_lin2"]["b"][0]
    c2_w = jnp.zeros((64, PRED_PAD), jnp.float32).at[:, :PRED_DIM].set(w2)
    c2_b = jnp.zeros((PRED_PAD,), jnp.float32).at[:PRED_DIM].set(b2)

    if fused:
        # Encoder layer 2 of both modalities emitted as one (tm, 256) slab:
        # enc = relu(t1 @ [te_w2|0] + i1 @ [0|ie_w2] + [te_b2|ie_b2]).
        z = jnp.zeros((ENC_HIDDEN, SHARED_DIM), jnp.float32)
        e2_wt = jnp.concatenate([te_w2, z], axis=1)                       # (256, 256)
        e2_wi = jnp.concatenate([z, ie_w2], axis=1)                       # (256, 256)
        e2_b = jnp.concatenate([te_b2, ie_b2], axis=0)
        # Aligner 1: block-diagonal (256, 256); aligner 2: block-diagonal (256, 128).
        a1_w = (jnp.zeros((2 * SHARED_DIM, 2 * SHARED_DIM), jnp.float32)
                .at[:SHARED_DIM, :SHARED_DIM].set(ta_w1)
                .at[SHARED_DIM:, SHARED_DIM:].set(ia_w1))
        a1_b = jnp.concatenate([ta_b1, ia_b1], axis=0)
        a2_w = (jnp.zeros((2 * SHARED_DIM, 2 * SIM_DIM), jnp.float32)
                .at[:SHARED_DIM, :SIM_DIM].set(ta_w2)
                .at[SHARED_DIM:, SIM_DIM:].set(ia_w2))
        a2_b = jnp.concatenate([ta_b2, ia_b2], axis=0)
        weights = (te_w1, ie_w1, e2_wt, e2_wi, a1_w, a2_w, c1_w, c2_w)
        biases = (("te1", te_b1), ("ie1", ie_b1), ("e2", e2_b),
                  ("a1", a1_b), ("a2", a2_b), ("c1", c1_b), ("c2", c2_b))
    else:
        # Per-modality layout (MXU-tile-exact on 128-wide MXUs); only aligner-2 is padded so
        # the aligned slab is emitted lane-dense without a concat.
        z = jnp.zeros((SHARED_DIM, SIM_DIM), jnp.float32)
        al2_wt = jnp.concatenate([ta_w2, z], axis=1)                      # (128, 128)
        al2_wi = jnp.concatenate([z, ia_w2], axis=1)                      # (128, 128)
        slab_b = jnp.concatenate([ta_b2, ia_b2], axis=0)                  # (128,)
        weights = (te_w1, te_w2, ie_w1, ie_w2, ta_w1, ia_w1, al2_wt, al2_wi, c1_w, c2_w)
        biases = (("te1", te_b1), ("te2", te_b2), ("ie1", ie_b1), ("ie2", ie_b2),
                  ("ta1", ta_b1), ("ia1", ia_b1), ("slab", slab_b),
                  ("c1", c1_b), ("c2", c2_b))

    bias_packed, offsets = _pack_biases(biases)
    weights = tuple(w.astype(jnp.bfloat16) for w in weights)
    return {"weights": weights, "bias": bias_packed, "offsets": offsets, "fused": fused}


# ----------------------------- pure-JAX reference (same math) -------------------------

def similarity_reference(text, image, params):
    offsets = params["offsets"]
    bias_arr = params["bias"]

    def bias(name):
        off, dim = offsets[name]
        return bias_arr[:, off:off + dim]

    math_fn = _fused_math if params["fused"] else _unfused_math
    slab, pred = math_fn(text, image, params["weights"], bias)
    # Mirror the kernel's bf16 output store.
    slab = slab.astype(jnp.bfloat16).astype(jnp.float32)
    pred = pred.astype(jnp.bfloat16).astype(jnp.float32)
    return slab[:, :SIM_DIM], slab[:, SIM_DIM:], pred[:, :PRED_DIM]


# ----------------------------------- demo / test --------------------------------------

if __name__ == "__main__":
    root = jax.random.PRNGKey(0)
    k_in, k_params, k_in2 = jax.random.split(root, 3)
    k_text, k_image = jax.random.split(k_in)
    k_text2, k_image2 = jax.random.split(k_in2)

    B = 8
    text = jax.random.normal(k_text, (B, CLIP_DIM), jnp.float32)
    image = jax.random.normal(k_image, (B, CLIP_DIM), jnp.float32)

    raw = init_raw_params(k_params)

    def check(t_out, i_out, p_out, t_ref, i_ref, p_ref, batch):
        assert t_out.shape == (batch, SIM_DIM)
        assert i_out.shape == (batch, SIM_DIM)
        assert p_out.shape == (batch, PRED_DIM)
        assert bool(jnp.all(jnp.isfinite(t_out)))
        assert bool(jnp.all(jnp.isfinite(i_out)))
        assert bool(jnp.all(jnp.isfinite(p_out)))
        assert bool(jnp.allclose(t_out, t_ref, atol=2e-2, rtol=2e-2))
        assert bool(jnp.allclose(i_out, i_ref, atol=2e-2, rtol=2e-2))
        assert bool(jnp.allclose(p_out, p_ref, atol=2e-2, rtol=2e-2))

    # Auto-selected variant (fused on v6e/v7x, unfused on v5e), single-tile small batch.
    params_auto = fold_params(raw)
    outs = similarity_forward(text, image, params_auto)
    jax.block_until_ready(outs)
    check(*outs, *similarity_reference(text, image, params_auto), B)

    # Both weight layouts, to verify they lower and agree on this chip.
    for fused in (True, False):
        params_v = fold_params(raw, fused=fused)
        outs_v = similarity_forward(text, image, params_v)
        jax.block_until_ready(outs_v)
        check(*outs_v, *similarity_reference(text, image, params_v), B)

    # Multi-tile grid path (small block_rows to force several grid steps).
    B2 = 40
    text2 = jax.random.normal(k_text2, (B2, CLIP_DIM), jnp.float32)
    image2 = jax.random.normal(k_image2, (B2, CLIP_DIM), jnp.float32)
    outs2 = similarity_forward(text2, image2, params_auto, block_rows=16)
    jax.block_until_ready(outs2)
    check(*outs2, *similarity_reference(text2, image2, params_auto), B2)

    print("KERNEL_OK")
</pallas_src>

<mosaic_0001>
module attributes {stable_mosaic.version = 11 : i64} {
  func.func @kernel(%arg0: i32, %arg1: memref<16x512xf32, #tpu.memory_space<vmem>>, %arg2: memref<16x512xf32, #tpu.memory_space<vmem>>, %arg3: memref<512x256xbf16, #tpu.memory_space<vmem>>, %arg4: memref<256x128xbf16, #tpu.memory_space<vmem>>, %arg5: memref<512x256xbf16, #tpu.memory_space<vmem>>, %arg6: memref<256x128xbf16, #tpu.memory_space<vmem>>, %arg7: memref<128x128xbf16, #tpu.memory_space<vmem>>, %arg8: memref<128x128xbf16, #tpu.memory_space<vmem>>, %arg9: memref<128x128xbf16, #tpu.memory_space<vmem>>, %arg10: memref<128x128xbf16, #tpu.memory_space<vmem>>, %arg11: memref<128x64xbf16, #tpu.memory_space<vmem>>, %arg12: memref<64x128xbf16, #tpu.memory_space<vmem>>, %arg13: memref<1x1408xf32, #tpu.memory_space<vmem>>, %arg14: memref<16x256xbf16, #tpu.memory_space<vmem>>) attributes {dimension_semantics = [#tpu.dimension_semantics<parallel>], iteration_bounds = array<i64: 1>, scalar_prefetch = 0 : i64, scratch_operands = 0 : i64, tpu.core_type = #tpu.core_type<tc>, window_params = [{transform_indices = @transform_0, window_bounds = array<i64: 16, 512>}, {transform_indices = @transform_1, window_bounds = array<i64: 16, 512>}, {pipeline_mode = #tpu.pipeline_mode<synchronous>, transform_indices = @transform_2, window_bounds = array<i64: 512, 256>}, {pipeline_mode = #tpu.pipeline_mode<synchronous>, transform_indices = @transform_3, window_bounds = array<i64: 256, 128>}, {pipeline_mode = #tpu.pipeline_mode<synchronous>, transform_indices = @transform_4, window_bounds = array<i64: 512, 256>}, {pipeline_mode = #tpu.pipeline_mode<synchronous>, transform_indices = @transform_5, window_bounds = array<i64: 256, 128>}, {pipeline_mode = #tpu.pipeline_mode<synchronous>, transform_indices = @transform_6, window_bounds = array<i64: 128, 128>}, {pipeline_mode = #tpu.pipeline_mode<synchronous>, transform_indices = @transform_7, window_bounds = array<i64: 128, 128>}, {pipeline_mode = #tpu.pipeline_mode<synchronous>, transform_indices = @transform_8, window_bounds = array<i64: 128, 128>}, {pipeline_mode = #tpu.pipeline_mode<synchronous>, transform_indices = @transform_9, window_bounds = array<i64: 128, 128>}, {pipeline_mode = #tpu.pipeline_mode<synchronous>, transform_indices = @transform_10, window_bounds = array<i64: 128, 64>}, {pipeline_mode = #tpu.pipeline_mode<synchronous>, transform_indices = @transform_11, window_bounds = array<i64: 64, 128>}, {pipeline_mode = #tpu.pipeline_mode<synchronous>, transform_indices = @transform_12, window_bounds = array<i64: 1, 1408>}, {transform_indices = @transform_13, window_bounds = array<i64: 16, 256>}]} {
    %c0 = arith.constant 0 : index
    %c0_0 = arith.constant 0 : index
    %0 = vector.load %arg3[%c0, %c0_0] : memref<512x256xbf16, #tpu.memory_space<vmem>>, vector<512x256xbf16>
    %c0_1 = arith.constant 0 : index
    %c0_2 = arith.constant 0 : index
    %1 = vector.load %arg4[%c0_1, %c0_2] : memref<256x128xbf16, #tpu.memory_space<vmem>>, vector<256x128xbf16>
    %c0_3 = arith.constant 0 : index
    %c0_4 = arith.constant 0 : index
    %2 = vector.load %arg5[%c0_3, %c0_4] : memref<512x256xbf16, #tpu.memory_space<vmem>>, vector<512x256xbf16>
    %c0_5 = arith.constant 0 : index
    %c0_6 = arith.constant 0 : index
    %3 = vector.load %arg6[%c0_5, %c0_6] : memref<256x128xbf16, #tpu.memory_space<vmem>>, vector<256x128xbf16>
    %c0_7 = arith.constant 0 : index
    %c0_8 = arith.constant 0 : index
    %4 = vector.load %arg7[%c0_7, %c0_8] : memref<128x128xbf16, #tpu.memory_space<vmem>>, vector<128x128xbf16>
    %c0_9 = arith.constant 0 : index
    %c0_10 = arith.constant 0 : index
    %5 = vector.load %arg8[%c0_9, %c0_10] : memref<128x128xbf16, #tpu.memory_space<vmem>>, vector<128x128xbf16>
    %c0_11 = arith.constant 0 : index
    %c0_12 = arith.constant 0 : index
    %6 = vector.load %arg9[%c0_11, %c0_12] : memref<128x128xbf16, #tpu.memory_space<vmem>>, vector<128x128xbf16>
    %c0_13 = arith.constant 0 : index
    %c0_14 = arith.constant 0 : index
    %7 = vector.load %arg10[%c0_13, %c0_14] : memref<128x128xbf16, #tpu.memory_space<vmem>>, vector<128x128xbf16>
    %c0_15 = arith.constant 0 : index
    %c0_16 = arith.constant 0 : index
    %8 = vector.load %arg11[%c0_15, %c0_16] : memref<128x64xbf16, #tpu.memory_space<vmem>>, vector<128x64xbf16>
    %c0_17 = arith.constant 0 : index
    %c0_18 = arith.constant 0 : index
    %9 = vector.load %arg12[%c0_17, %c0_18] : memref<64x128xbf16, #tpu.memory_space<vmem>>, vector<64x128xbf16>
    %c0_19 = arith.constant 0 : index
    %c0_20 = arith.constant 0 : index
    %10 = vector.load %arg1[%c0_19, %c0_20] : memref<16x512xf32, #tpu.memory_space<vmem>>, vector<16x512xf32>
    %c0_21 = arith.constant 0 : index
    %c0_22 = arith.constant 0 : index
    %11 = vector.load %arg2[%c0_21, %c0_22] : memref<16x512xf32, #tpu.memory_space<vmem>>, vector<16x512xf32>
    %c0_23 = arith.constant 0 : index
    %c0_24 = arith.constant 0 : index
    %12 = vector.load %arg13[%c0_23, %c0_24] : memref<1x1408xf32, #tpu.memory_space<vmem>>, vector<1x256xf32>
    %13 = arith.truncf %10 : vector<16x512xf32> to vector<16x512xbf16>
    %cst = arith.constant dense<0.000000e+00> : vector<16x256xf32>
    %14 = tpu.matmul %13, %0, %cst {dimension_numbers = #tpu.dot_dimension_numbers<[1], [0], [0], [1], [0, 0, 1, 1], [], []>} : vector<16x512xbf16>, vector<512x256xbf16>, vector<16x256xf32> -> vector<16x256xf32>
    %15 = vector.broadcast %12 : vector<1x256xf32> to vector<16x256xf32>
    %16 = arith.addf %14, %15 : vector<16x256xf32>
    %cst_25 = arith.constant 0.000000e+00 : f32
    %17 = vector.broadcast %cst_25 : f32 to vector<16x256xf32>
    %18 = arith.maximumf %16, %17 : vector<16x256xf32>
    %c0_26 = arith.constant 0 : index
    %c256 = arith.constant 256 : index
    %19 = vector.load %arg13[%c0_26, %c256] : memref<1x1408xf32, #tpu.memory_space<vmem>>, vector<1x128xf32>
    %20 = arith.truncf %18 : vector<16x256xf32> to vector<16x256xbf16>
    %cst_27 = arith.constant dense<0.000000e+00> : vector<16x128xf32>
    %21 = tpu.matmul %20, %1, %cst_27 {dimension_numbers = #tpu.dot_dimension_numbers<[1], [0], [0], [1], [0, 0, 1, 1], [], []>} : vector<16x256xbf16>, vector<256x128xbf16>, vector<16x128xf32> -> vector<16x128xf32>
    %22 = vector.broadcast %19 : vector<1x128xf32> to vector<16x128xf32>
    %23 = arith.addf %21, %22 : vector<16x128xf32>
    %cst_28 = arith.constant 0.000000e+00 : f32
    %24 = vector.broadcast %cst_28 : f32 to vector<16x128xf32>
    %25 = arith.maximumf %23, %24 : vector<16x128xf32>
    %c0_29 = arith.constant 0 : index
    %c384 = arith.constant 384 : index
    %26 = vector.load %arg13[%c0_29, %c384] : memref<1x1408xf32, #tpu.memory_space<vmem>>, vector<1x256xf32>
    %27 = arith.truncf %11 : vector<16x512xf32> to vector<16x512xbf16>
    %cst_30 = arith.constant dense<0.000000e+00> : vector<16x256xf32>
    %28 = tpu.matmul %27, %2, %cst_30 {dimension_numbers = #tpu.dot_dimension_numbers<[1], [0], [0], [1], [0, 0, 1, 1], [], []>} : vector<16x512xbf16>, vector<512x256xbf16>, vector<16x256xf32> -> vector<16x256xf32>
    %29 = vector.broadcast %26 : vector<1x256xf32> to vector<16x256xf32>
    %30 = arith.addf %28, %29 : vector<16x256xf32>
    %cst_31 = arith.constant 0.000000e+00 : f32
    %31 = vector.broadcast %cst_31 : f32 to vector<16x256xf32>
    %32 = arith.maximumf %30, %31 : vector<16x256xf32>
    %c0_32 = arith.constant 0 : index
    %c640 = arith.constant 640 : index
    %33 = vector.load %arg13[%c0_32, %c640] : memref<1x1408xf32, #tpu.memory_space<vmem>>, vector<1x128xf32>
    %34 = arith.truncf %32 : vector<16x256xf32> to vector<16x256xbf16>
    %cst_33 = arith.constant dense<0.000000e+00> : vector<16x128xf32>
    %35 = tpu.matmul %34, %3, %cst_33 {dimension_numbers = #tpu.dot_dimension_numbers<[1], [0], [0], [1], [0, 0, 1, 1], [], []>} : vector<16x256xbf16>, vector<256x128xbf16>, vector<16x128xf32> -> vector<16x128xf32>
    %36 = vector.broadcast %33 : vector<1x128xf32> to vector<16x128xf32>
    %37 = arith.addf %35, %36 : vector<16x128xf32>
    %cst_34 = arith.constant 0.000000e+00 : f32
    %38 = vector.broadcast %cst_34 : f32 to vector<16x128xf32>
    %39 = arith.maximumf %37, %38 : vector<16x128xf32>
    %c0_35 = arith.constant 0 : index
    %c768 = arith.constant 768 : index
    %40 = vector.load %arg13[%c0_35, %c768] : memref<1x1408xf32, #tpu.memory_space<vmem>>, vector<1x128xf32>
    %41 = arith.truncf %25 : vector<16x128xf32> to vector<16x128xbf16>
    %cst_36 = arith.constant dense<0.000000e+00> : vector<16x128xf32>
    %42 = tpu.matmul %41, %4, %cst_36 {dimension_numbers = #tpu.dot_dimension_numbers<[1], [0], [0], [1], [0, 0, 1, 1], [], []>} : vector<16x128xbf16>, vector<128x128xbf16>, vector<16x128xf32> -> vector<16x128xf32>
    %43 = vector.broadcast %40 : vector<1x128xf32> to vector<16x128xf32>
    %44 = arith.addf %42, %43 : vector<16x128xf32>
    %cst_37 = arith.constant 0.000000e+00 : f32
    %45 = vector.broadcast %cst_37 : f32 to vector<16x128xf32>
    %46 = arith.maximumf %44, %45 : vector<16x128xf32>
    %c0_38 = arith.constant 0 : index
    %c896 = arith.constant 896 : index
    %47 = vector.load %arg13[%c0_38, %c896] : memref<1x1408xf32, #tpu.memory_space<vmem>>, vector<1x128xf32>
    %48 = arith.truncf %39 : vector<16x128xf32> to vector<16x128xbf16>
    %cst_39 = arith.constant dense<0.000000e+00> : vector<16x128xf32>
    %49 = tpu.matmul %48, %5, %cst_39 {dimension_numbers = #tpu.dot_dimension_numbers<[1], [0], [0], [1], [0, 0, 1, 1], [], []>} : vector<16x128xbf16>, vector<128x128xbf16>, vector<16x128xf32> -> vector<16x128xf32>
    %50 = vector.broadcast %47 : vector<1x128xf32> to vector<16x128xf32>
    %51 = arith.addf %49, %50 : vector<16x128xf32>
    %cst_40 = arith.constant 0.000000e+00 : f32
    %52 = vector.broadcast %cst_40 : f32 to vector<16x128xf32>
    %53 = arith.maximumf %51, %52 : vector<16x128xf32>
    %54 = arith.truncf %46 : vector<16x128xf32> to vector<16x128xbf16>
    %cst_41 = arith.constant dense<0.000000e+00> : vector<16x128xf32>
    %55 = tpu.matmul %54, %6, %cst_41 {dimension_numbers = #tpu.dot_dimension_numbers<[1], [0], [0], [1], [0, 0, 1, 1], [], []>} : vector<16x128xbf16>, vector<128x128xbf16>, vector<16x128xf32> -> vector<16x128xf32>
    %56 = arith.truncf %53 : vector<16x128xf32> to vector<16x128xbf16>
    %cst_42 = arith.constant dense<0.000000e+00> : vector<16x128xf32>
    %57 = tpu.matmul %56, %7, %cst_42 {dimension_numbers = #tpu.dot_dimension_numbers<[1], [0], [0], [1], [0, 0, 1, 1], [], []>} : vector<16x128xbf16>, vector<128x128xbf16>, vector<16x128xf32> -> vector<16x128xf32>
    %58 = arith.addf %55, %57 : vector<16x128xf32>
    %c0_43 = arith.constant 0 : index
    %c1024 = arith.constant 1024 : index
    %59 = vector.load %arg13[%c0_43, %c1024] : memref<1x1408xf32, #tpu.memory_space<vmem>>, vector<1x128xf32>
    %60 = vector.broadcast %59 : vector<1x128xf32> to vector<16x128xf32>
    %61 = arith.addf %58, %60 : vector<16x128xf32>
    %cst_44 = arith.constant 0.000000e+00 : f32
    %62 = vector.broadcast %cst_44 : f32 to vector<16x128xf32>
    %63 = arith.maximumf %61, %62 : vector<16x128xf32>
    %c0_45 = arith.constant 0 : index
    %c1152 = arith.constant 1152 : index
    %64 = vector.load %arg13[%c0_45, %c1152] : memref<1x1408xf32, #tpu.memory_space<vmem>>, vector<1x64xf32>
    %65 = arith.truncf %63 : vector<16x128xf32> to vector<16x128xbf16>
    %cst_46 = arith.constant dense<0.000000e+00> : vector<16x64xf32>
    %66 = tpu.matmul %65, %8, %cst_46 {dimension_numbers = #tpu.dot_dimension_numbers<[1], [0], [0], [1], [0, 0, 1, 1], [], []>} : vector<16x128xbf16>, vector<128x64xbf16>, vector<16x64xf32> -> vector<16x64xf32>
    %67 = vector.broadcast %64 : vector<1x64xf32> to vector<16x64xf32>
    %68 = arith.addf %66, %67 : vector<16x64xf32>
    %cst_47 = arith.constant 0.000000e+00 : f32
    %69 = vector.broadcast %cst_47 : f32 to vector<16x64xf32>
    %70 = arith.maximumf %68, %69 : vector<16x64xf32>
    %71 = arith.truncf %70 : vector<16x64xf32> to vector<16x64xbf16>
    %cst_48 = arith.constant dense<0.000000e+00> : vector<16x128xf32>
    %72 = tpu.matmul %71, %9, %cst_48 {dimension_numbers = #tpu.dot_dimension_numbers<[1], [0], [0], [1], [0, 0, 1, 1], [], []>} : vector<16x64xbf16>, vector<64x128xbf16>, vector<16x128xf32> -> vector<16x128xf32>
    %c0_49 = arith.constant 0 : index
    %c1280 = arith.constant 1280 : index
    %73 = vector.load %arg13[%c0_49, %c1280] : memref<1x1408xf32, #tpu.memory_space<vmem>>, vector<1x128xf32>
    %74 = vector.broadcast %73 : vector<1x128xf32> to vector<16x128xf32>
    %75 = arith.addf %72, %74 : vector<16x128xf32>
    %76 = arith.truncf %63 : vector<16x128xf32> to vector<16x128xbf16>
    %c0_50 = arith.constant 0 : index
    %c0_51 = arith.constant 0 : index
    %77 = vector.load %arg14[%c0_50, %c0_51] : memref<16x256xbf16, #tpu.memory_space<vmem>>, vector<16x128xbf16>
    tpu.vector_store %arg14[%c0_50, %c0_51], %76 {strides = array<i32>} : memref<16x256xbf16, #tpu.memory_space<vmem>>, vector<16x128xbf16>,
    %78 = arith.truncf %75 : vector<16x128xf32> to vector<16x128xbf16>
    %c0_52 = arith.constant 0 : index
    %c128 = arith.constant 128 : index
    %79 = vector.load %arg14[%c0_52, %c128] : memref<16x256xbf16, #tpu.memory_space<vmem>>, vector<16x128xbf16>
    tpu.vector_store %arg14[%c0_52, %c128], %78 {strides = array<i32>} : memref<16x256xbf16, #tpu.memory_space<vmem>>, vector<16x128xbf16>,
    return
  }
  func.func @transform_0(%arg0: i32) -> (i32, i32) {
    %c0_i32 = arith.constant 0 : i32
    %c0_i32_0 = arith.constant 0 : i32
    return %arg0, %c0_i32 : i32, i32
  }
  func.func @transform_1(%arg0: i32) -> (i32, i32) {
    %c0_i32 = arith.constant 0 : i32
    %c0_i32_0 = arith.constant 0 : i32
    return %arg0, %c0_i32 : i32, i32
  }
  func.func @transform_2(%arg0: i32) -> (i32, i32) {
    %c0_i32 = arith.constant 0 : i32
    %c0_i32_0 = arith.constant 0 : i32
    %c0_i32_1 = arith.constant 0 : i32
    return %c0_i32, %c0_i32_0 : i32, i32
  }
  func.func @transform_3(%arg0: i32) -> (i32, i32) {
    %c0_i32 = arith.constant 0 : i32
    %c0_i32_0 = arith.constant 0 : i32
    %c0_i32_1 = arith.constant 0 : i32
    return %c0_i32, %c0_i32_0 : i32, i32
  }
  func.func @transform_4(%arg0: i32) -> (i32, i32) {
    %c0_i32 = arith.constant 0 : i32
    %c0_i32_0 = arith.constant 0 : i32
    %c0_i32_1 = arith.constant 0 : i32
    return %c0_i32, %c0_i32_0 : i32, i32
  }
  func.func @transform_5(%arg0: i32) -> (i32, i32) {
    %c0_i32 = arith.constant 0 : i32
    %c0_i32_0 = arith.constant 0 : i32
    %c0_i32_1 = arith.constant 0 : i32
    return %c0_i32, %c0_i32_0 : i32, i32
  }
  func.func @transform_6(%arg0: i32) -> (i32, i32) {
    %c0_i32 = arith.constant 0 : i32
    %c0_i32_0 = arith.constant 0 : i32
    %c0_i32_1 = arith.constant 0 : i32
    return %c0_i32, %c0_i32_0 : i32, i32
  }
  func.func @transform_7(%arg0: i32) -> (i32, i32) {
    %c0_i32 = arith.constant 0 : i32
    %c0_i32_0 = arith.constant 0 : i32
    %c0_i32_1 = arith.constant 0 : i32
    return %c0_i32, %c0_i32_0 : i32, i32
  }
  func.func @transform_8(%arg0: i32) -> (i32, i32) {
    %c0_i32 = arith.constant 0 : i32
    %c0_i32_0 = arith.constant 0 : i32
    %c0_i32_1 = arith.constant 0 : i32
    return %c0_i32, %c0_i32_0 : i32, i32
  }
  func.func @transform_9(%arg0: i32) -> (i32, i32) {
    %c0_i32 = arith.constant 0 : i32
    %c0_i32_0 = arith.constant 0 : i32
    %c0_i32_1 = arith.constant 0 : i32
    return %c0_i32, %c0_i32_0 : i32, i32
  }
  func.func @transform_10(%arg0: i32) -> (i32, i32) {
    %c0_i32 = arith.constant 0 : i32
    %c0_i32_0 = arith.constant 0 : i32
    %c0_i32_1 = arith.constant 0 : i32
    return %c0_i32, %c0_i32_0 : i32, i32
  }
  func.func @transform_11(%arg0: i32) -> (i32, i32) {
    %c0_i32 = arith.constant 0 : i32
    %c0_i32_0 = arith.constant 0 : i32
    %c0_i32_1 = arith.constant 0 : i32
    return %c0_i32, %c0_i32_0 : i32, i32
  }
  func.func @transform_12(%arg0: i32) -> (i32, i32) {
    %c0_i32 = arith.constant 0 : i32
    %c0_i32_0 = arith.constant 0 : i32
    %c0_i32_1 = arith.constant 0 : i32
    return %c0_i32, %c0_i32_0 : i32, i32
  }
  func.func @transform_13(%arg0: i32) -> (i32, i32) {
    %c0_i32 = arith.constant 0 : i32
    %c0_i32_0 = arith.constant 0 : i32
    return %arg0, %c0_i32 : i32, i32
  }
}

</mosaic_0001>

<llo_original>
// kernel: tpu_custom_call.1
$region0: #{tpu_custom_call.1}
  #allocation0 [shape = 'u32[]', space=smem, size = 0x4, offset = 0x4, fixed_abs, tag = 'smem constant byte address 0x4 - core index']
  #allocation1 [shape = 'u32[144,128]{1,0:T(1,128)}', space=vmem, size = 0x12000, scoped, tag = 'internal scratch']
  %s0 = inlined_call_operand.vmem [shape: f32[16,512], index: 0, kind: input, shape index: {}]
  %s1 = inlined_call_operand.hbm [shape: f32[16,512], index: 1, kind: input, shape index: {}]
  %s2 = inlined_call_operand.hbm [shape: bf16[512,256], index: 2, kind: input, shape index: {}]
  %s3 = inlined_call_operand.hbm [shape: bf16[256,128], index: 3, kind: input, shape index: {}]
  %s4 = inlined_call_operand.hbm [shape: bf16[512,256], index: 4, kind: input, shape index: {}]
  %s5 = inlined_call_operand.hbm [shape: bf16[256,128], index: 5, kind: input, shape index: {}]
  %s6 = inlined_call_operand.hbm [shape: bf16[128,128], index: 6, kind: input, shape index: {}]
  %s7 = inlined_call_operand.hbm [shape: bf16[128,128], index: 7, kind: input, shape index: {}]
  %s8 = inlined_call_operand.hbm [shape: bf16[128,128], index: 8, kind: input, shape index: {}]
  %s9 = inlined_call_operand.hbm [shape: bf16[128,128], index: 9, kind: input, shape index: {}]
  %s10 = inlined_call_operand.vmem [shape: bf16[128,64], index: 10, kind: input, shape index: {}]
  %s11 = inlined_call_operand.vmem [shape: bf16[64,128], index: 11, kind: input, shape index: {}]
  %s12 = inlined_call_operand.vmem [shape: f32[1,1408], index: 12, kind: input, shape index: {}]
  %s13 = inlined_call_operand.hbm [shape: bf16[16,256], index: 13, kind: output, shape index: {}]
  %s14 = sld [smem:[#allocation0]]
  $region98: #{tpu_custom_call.1} parent=0
    _
  %s16 = ssub.s32 1, %s14
  %s17 = scalar_select 0, %s16, %s14
  $region1: #{tpu_custom_call.1} parent=0
    #allocation2 [shape = 'u8[32768]{0}', space=vmem, size = 0x8000, scoped, tag = 'input window, operand 1, single buffered']
    #allocation3 [shape = 's32[1]{0}', space=sflag, size = 0x4, scoped, tag = 'scoped memory for tpu_custom_call.1']
    #allocation4 [shape = 's32[1]{0}', space=sflag, size = 0x4, scoped, tag = 'scoped memory for tpu_custom_call.1']
    #allocation5 [shape = 'u8[262144]{0}', space=vmem, size = 0x40000, scoped, tag = 'input window, operand 2, single buffered']
    #allocation6 [shape = 's32[1]{0}', space=sflag, size = 0x4, scoped, tag = 'scoped memory for tpu_custom_call.1']
    #allocation7 [shape = 'u8[65536]{0}', space=vmem, size = 0x10000, scoped, tag = 'input window, operand 3, single buffered']
    #allocation8 [shape = 'u8[262144]{0}', space=vmem, size = 0x40000, scoped, tag = 'input window, operand 4, single buffered']
    #allocation9 [shape = 's32[1]{0}', space=sflag, size = 0x4, scoped, tag = 'scoped memory for tpu_custom_call.1']
    #allocation10 [shape = 'u8[65536]{0}', space=vmem, size = 0x10000, scoped, tag = 'input window, operand 5, single buffered']
    #allocation11 [shape = 'u8[32768]{0}', space=vmem, size = 0x8000, scoped, tag = 'input window, operand 6, single buffered']
    #allocation12 [shape = 's32[1]{0}', space=sflag, size = 0x4, scoped, tag = 'scoped memory for tpu_custom_call.1']
    #allocation13 [shape = 'u8[32768]{0}', space=vmem, size = 0x8000, scoped, tag = 'input window, operand 7, single buffered']
    #allocation14 [shape = 'u8[32768]{0}', space=vmem, size = 0x8000, scoped, tag = 'input window, operand 8, single buffered']
    #allocation15 [shape = 's32[1]{0}', space=sflag, size = 0x4, scoped, tag = 'scoped memory for tpu_custom_call.1']
    #allocation16 [shape = 'u8[32768]{0}', space=vmem, size = 0x8000, scoped, tag = 'input window, operand 9, single buffered']
    #allocation17 [shape = 'u8[8192]{0}', space=vmem, size = 0x2000, scoped, tag = 'output window, operand 0, single buffered']
    %18 = vsyncpa [#allocation3], 0
    %19 = vsyncpa [#allocation6], 0
    %20 = vsyncpa [#allocation9], 0
    %21 = vsyncpa [#allocation12], 0
    %22 = vsyncpa [#allocation15], 0
    %23 = vsyncpa [#allocation4], 0
    // Predicated region
    $region2: #{tpu_custom_call.1} parent=1 // pred_check
      _
    $region3: #{tpu_custom_call.1} parent=1 // pred_check_branch
      %25 = sbr.rel (0) target = $region5
    $region4: #{tpu_custom_call.1} parent=1 // pred_region
      _
    $region5: #{tpu_custom_call.1} parent=1 // pred_fallthru
      _
    // Predicated region
    $region6: #{tpu_custom_call.1} parent=1 // pred_check
      _
    $region7: #{tpu_custom_call.1} parent=1 // pred_check_branch
      %27 = sbr.rel (0) target = $region9
    $region8: #{tpu_custom_call.1} parent=1 // pred_region
      %s29 = ssub.s32 1024, 1024
      %30 = vsyncadd [#allocation3], %s29
      %s31 = sshll.u32 [#allocation2], 4
      %s32 = int_to_ptr.vmem [resolvable:$true] %s31
      %37 = dma.hbm_to_vmem [thread:$0]  %s1, 1024, %s32, [#allocation3], 512, 512, 32
    $region9: #{tpu_custom_call.1} parent=1 // pred_fallthru
      _
    // Predicated region
    $region10: #{tpu_custom_call.1} parent=1 // pred_check
      _
    $region11: #{tpu_custom_call.1} parent=1 // pred_check_branch
      %39 = sbr.rel (0) target = $region13
    $region12: #{tpu_custom_call.1} parent=1 // pred_region
      %s41 = ssub.s32 8192, 8192
      %42 = vsyncadd [#allocation6], %s41
      %s43 = sshll.u32 [#allocation5], 4
      %s44 = int_to_ptr.vmem [resolvable:$true] %s43
      %49 = dma.hbm_to_vmem [thread:$0]  %s2, 8192, %s44, [#allocation6], 128, 128, 8
    $region13: #{tpu_custom_call.1} parent=1 // pred_fallthru
      _
    // Predicated region
    $region14: #{tpu_custom_call.1} parent=1 // pred_check
      _
    $region15: #{tpu_custom_call.1} parent=1 // pred_check_branch
      %51 = sbr.rel (0) target = $region17
    $region16: #{tpu_custom_call.1} parent=1 // pred_region
      %s53 = ssub.s32 2048, 2048
      %54 = vsyncadd [#allocation6], %s53
      %s55 = sshll.u32 [#allocation7], 4
      %s56 = int_to_ptr.vmem [resolvable:$true] %s55
      %61 = dma.hbm_to_vmem [thread:$0]  %s3, 2048, %s56, [#allocation6], 64, 64, 4
    $region17: #{tpu_custom_call.1} parent=1 // pred_fallthru
      _
    // Predicated region
    $region18: #{tpu_custom_call.1} parent=1 // pred_check
      _
    $region19: #{tpu_custom_call.1} parent=1 // pred_check_branch
      %63 = sbr.rel (0) target = $region21
    $region20: #{tpu_custom_call.1} parent=1 // pred_region
      %s65 = ssub.s32 8192, 8192
      %66 = vsyncadd [#allocation9], %s65
      %s67 = sshll.u32 [#allocation8], 4
      %s68 = int_to_ptr.vmem [resolvable:$true] %s67
      %73 = dma.hbm_to_vmem [thread:$0]  %s4, 8192, %s68, [#allocation9], 128, 128, 8
    $region21: #{tpu_custom_call.1} parent=1 // pred_fallthru
      _
    // Predicated region
    $region22: #{tpu_custom_call.1} parent=1 // pred_check
      _
    $region23: #{tpu_custom_call.1} parent=1 // pred_check_branch
      %75 = sbr.rel (0) target = $region25
    $region24: #{tpu_custom_call.1} parent=1 // pred_region
      %s77 = ssub.s32 2048, 2048
      %78 = vsyncadd [#allocation9], %s77
      %s79 = sshll.u32 [#allocation10], 4
      %s80 = int_to_ptr.vmem [resolvable:$true] %s79
      %85 = dma.hbm_to_vmem [thread:$0]  %s5, 2048, %s80, [#allocation9], 64, 64, 4
    $region25: #{tpu_custom_call.1} parent=1 // pred_fallthru
      _
    // Predicated region
    $region26: #{tpu_custom_call.1} parent=1 // pred_check
      _
    $region27: #{tpu_custom_call.1} parent=1 // pred_check_branch
      %87 = sbr.rel (0) target = $region29
    $region28: #{tpu_custom_call.1} parent=1 // pred_region
      %s89 = ssub.s32 1024, 1024
      %90 = vsyncadd [#allocation12], %s89
      %s91 = sshll.u32 [#allocation11], 4
      %s92 = int_to_ptr.vmem [resolvable:$true] %s91
      %97 = dma.hbm_to_vmem [thread:$0]  %s6, 1024, %s92, [#allocation12], 64, 64, 4
    $region29: #{tpu_custom_call.1} parent=1 // pred_fallthru
      _
    // Predicated region
    $region30: #{tpu_custom_call.1} parent=1 // pred_check
      _
    $region31: #{tpu_custom_call.1} parent=1 // pred_check_branch
      %99 = sbr.rel (0) target = $region33
    $region32: #{tpu_custom_call.1} parent=1 // pred_region
      %s101 = ssub.s32 1024, 1024
      %102 = vsyncadd [#allocation12], %s101
      %s103 = sshll.u32 [#allocation13], 4
      %s104 = int_to_ptr.vmem [resolvable:$true] %s103
      %109 = dma.hbm_to_vmem [thread:$0]  %s7, 1024, %s104, [#allocation12], 64, 64, 4
    $region33: #{tpu_custom_call.1} parent=1 // pred_fallthru
      _
    // Predicated region
    $region34: #{tpu_custom_call.1} parent=1 // pred_check
      _
    $region35: #{tpu_custom_call.1} parent=1 // pred_check_branch
      %111 = sbr.rel (0) target = $region37
    $region36: #{tpu_custom_call.1} parent=1 // pred_region
      %s113 = ssub.s32 1024, 1024
      %114 = vsyncadd [#allocation15], %s113
      %s115 = sshll.u32 [#allocation14], 4
      %s116 = int_to_ptr.vmem [resolvable:$true] %s115
      %121 = dma.hbm_to_vmem [thread:$0]  %s8, 1024, %s116, [#allocation15], 64, 64, 4
    $region37: #{tpu_custom_call.1} parent=1 // pred_fallthru
      _
    // Predicated region
    $region38: #{tpu_custom_call.1} parent=1 // pred_check
      _
    $region39: #{tpu_custom_call.1} parent=1 // pred_check_branch
      %123 = sbr.rel (0) target = $region41
    $region40: #{tpu_custom_call.1} parent=1 // pred_region
      %s125 = ssub.s32 1024, 1024
      %126 = vsyncadd [#allocation15], %s125
      %s127 = sshll.u32 [#allocation16], 4
      %s128 = int_to_ptr.vmem [resolvable:$true] %s127
      %133 = dma.hbm_to_vmem [thread:$0]  %s9, 1024, %s128, [#allocation15], 64, 64, 4
    $region41: #{tpu_custom_call.1} parent=1 // pred_fallthru
      _
    // Predicated region
    $region42: #{tpu_custom_call.1} parent=1 // pred_check
      _
    $region43: #{tpu_custom_call.1} parent=1 // pred_check_branch
      %135 = sbr.rel (0) target = $region45
    $region44: #{tpu_custom_call.1} parent=1 // pred_region
      _
    $region45: #{tpu_custom_call.1} parent=1 // pred_fallthru
      _
    // Predicated region
    $region46: #{tpu_custom_call.1} parent=1 // pred_check
      _
    $region47: #{tpu_custom_call.1} parent=1 // pred_check_branch
      %137 = sbr.rel (0) target = $region49
    $region48: #{tpu_custom_call.1} parent=1 // pred_region
      _
    $region49: #{tpu_custom_call.1} parent=1 // pred_fallthru
      _
    // Predicated region
    $region50: #{tpu_custom_call.1} parent=1 // pred_check
      _
    $region51: #{tpu_custom_call.1} parent=1 // pred_check_branch
      %139 = sbr.rel (0) target = $region53
    $region52: #{tpu_custom_call.1} parent=1 // pred_region
      _
    $region53: #{tpu_custom_call.1} parent=1 // pred_fallthru
      _
    // Predicated region
    $region54: #{tpu_custom_call.1} parent=1 // pred_check
      _
    $region55: #{tpu_custom_call.1} parent=1 // pred_check_branch
      %141 = sbr.rel (0) target = $region57
    $region56: #{tpu_custom_call.1} parent=1 // pred_region
      %142 = dma.done [#allocation3], 1024
    $region57: #{tpu_custom_call.1} parent=1 // pred_fallthru
      _
    // Predicated region
    $region58: #{tpu_custom_call.1} parent=1 // pred_check
      _
    $region59: #{tpu_custom_call.1} parent=1 // pred_check_branch
      %144 = sbr.rel (0) target = $region61
    $region60: #{tpu_custom_call.1} parent=1 // pred_region
      %145 = dma.done [#allocation6], 8192
    $region61: #{tpu_custom_call.1} parent=1 // pred_fallthru
      _
    // Predicated region
    $region62: #{tpu_custom_call.1} parent=1 // pred_check
      _
    $region63: #{tpu_custom_call.1} parent=1 // pred_check_branch
      %147 = sbr.rel (0) target = $region65
    $region64: #{tpu_custom_call.1} parent=1 // pred_region
      %148 = dma.done [#allocation6], 2048
    $region65: #{tpu_custom_call.1} parent=1 // pred_fallthru
      _
    // Predicated region
    $region66: #{tpu_custom_call.1} parent=1 // pred_check
      _
    $region67: #{tpu_custom_call.1} parent=1 // pred_check_branch
      %150 = sbr.rel (0) target = $region69
    $region68: #{tpu_custom_call.1} parent=1 // pred_region
      %151 = dma.done [#allocation9], 8192
    $region69: #{tpu_custom_call.1} parent=1 // pred_fallthru
      _
    // Predicated region
    $region70: #{tpu_custom_call.1} parent=1 // pred_check
      _
    $region71: #{tpu_custom_call.1} parent=1 // pred_check_branch
      %153 = sbr.rel (0) target = $region73
    $region72: #{tpu_custom_call.1} parent=1 // pred_region
      %154 = dma.done [#allocation9], 2048
    $region73: #{tpu_custom_call.1} parent=1 // pred_fallthru
      _
    // Predicated region
    $region74: #{tpu_custom_call.1} parent=1 // pred_check
      _
    $region75: #{tpu_custom_call.1} parent=1 // pred_check_branch
      %156 = sbr.rel (0) target = $region77
    $region76: #{tpu_custom_call.1} parent=1 // pred_region
      %157 = dma.done [#allocation12], 1024
    $region77: #{tpu_custom_call.1} parent=1 // pred_fallthru
      _
    // Predicated region
    $region78: #{tpu_custom_call.1} parent=1 // pred_check
      _
    $region79: #{tpu_custom_call.1} parent=1 // pred_check_branch
      %159 = sbr.rel (0) target = $region81
    $region80: #{tpu_custom_call.1} parent=1 // pred_region
      %160 = dma.done [#allocation12], 1024
    $region81: #{tpu_custom_call.1} parent=1 // pred_fallthru
      _
    // Predicated region
    $region82: #{tpu_custom_call.1} parent=1 // pred_check
      _
    $region83: #{tpu_custom_call.1} parent=1 // pred_check_branch
      %162 = sbr.rel (0) target = $region85
    $region84: #{tpu_custom_call.1} parent=1 // pred_region
      %163 = dma.done [#allocation15], 1024
    $region85: #{tpu_custom_call.1} parent=1 // pred_fallthru
      _
    // Predicated region
    $region86: #{tpu_custom_call.1} parent=1 // pred_check
      _
    $region87: #{tpu_custom_call.1} parent=1 // pred_check_branch
      %165 = sbr.rel (0) target = $region89
    $region88: #{tpu_custom_call.1} parent=1 // pred_region
      %166 = dma.done [#allocation15], 1024
    $region89: #{tpu_custom_call.1} parent=1 // pred_fallthru
      _
    %v168 = vld [vmem:[#allocation5] sm:$0xff]
    %v169 = vld [vmem:[#allocation5 + $0x8] sm:$0xff]
    %v170 = vld [vmem:[#allocation5 + $0x10] sm:$0xff]
    %v171 = vld [vmem:[#allocation5 + $0x18] sm:$0xff]
    %v172 = vld [vmem:[#allocation5 + $0x20] sm:$0xff]
    %v173 = vld [vmem:[#allocation5 + $0x28] sm:$0xff]
    %v174 = vld [vmem:[#allocation5 + $0x30] sm:$0xff]
    %v175 = vld [vmem:[#allocation5 + $0x38] sm:$0xff]
    %v176 = vld [vmem:[#allocation5 + $0x40] sm:$0xff]
    %v177 = vld [vmem:[#allocation5 + $0x48] sm:$0xff]
    %v178 = vld [vmem:[#allocation5 + $0x50] sm:$0xff]
    %v179 = vld [vmem:[#allocation5 + $0x58] sm:$0xff]
    %v180 = vld [vmem:[#allocation5 + $0x60] sm:$0xff]
    %v181 = vld [vmem:[#allocation5 + $0x68] sm:$0xff]
    %v182 = vld [vmem:[#allocation5 + $0x70] sm:$0xff]
    %v183 = vld [vmem:[#allocation5 + $0x78] sm:$0xff]
    %v184 = vld [vmem:[#allocation5 + $0x80] sm:$0xff]
    %v185 = vld [vmem:[#allocation5 + $0x88] sm:$0xff]
    %v186 = vld [vmem:[#allocation5 + $0x90] sm:$0xff]
    %v187 = vld [vmem:[#allocation5 + $0x98] sm:$0xff]
    %v188 = vld [vmem:[#allocation5 + $0xa0] sm:$0xff]
    %v189 = vld [vmem:[#allocation5 + $0xa8] sm:$0xff]
    %v190 = vld [vmem:[#allocation5 + $0xb0] sm:$0xff]
    %v191 = vld [vmem:[#allocation5 + $0xb8] sm:$0xff]
    %v192 = vld [vmem:[#allocation5 + $0xc0] sm:$0xff]
    %v193 = vld [vmem:[#allocation5 + $0xc8] sm:$0xff]
    %v194 = vld [vmem:[#allocation5 + $0xd0] sm:$0xff]
    %v195 = vld [vmem:[#allocation5 + $0xd8] sm:$0xff]
    %v196 = vld [vmem:[#allocation5 + $0xe0] sm:$0xff]
    %v197 = vld [vmem:[#allocation5 + $0xe8] sm:$0xff]
    %v198 = vld [vmem:[#allocation5 + $0xf0] sm:$0xff]
    %v199 = vld [vmem:[#allocation5 + $0xf8] sm:$0xff]
    %v200 = vld [vmem:[#allocation5 + $0x100] sm:$0xff]
    %v201 = vld [vmem:[#allocation5 + $0x108] sm:$0xff]
    %v202 = vld [vmem:[#allocation5 + $0x110] sm:$0xff]
    %v203 = vld [vmem:[#allocation5 + $0x118] sm:$0xff]
    %v204 = vld [vmem:[#allocation5 + $0x120] sm:$0xff]
    %v205 = vld [vmem:[#allocation5 + $0x128] sm:$0xff]
    %v206 = vld [vmem:[#allocation5 + $0x130] sm:$0xff]
    %v207 = vld [vmem:[#allocation5 + $0x138] sm:$0xff]
    %v208 = vld [vmem:[#allocation5 + $0x140] sm:$0xff]
    %v209 = vld [vmem:[#allocation5 + $0x148] sm:$0xff]
    %v210 = vld [vmem:[#allocation5 + $0x150] sm:$0xff]
    %v211 = vld [vmem:[#allocation5 + $0x158] sm:$0xff]
    %v212 = vld [vmem:[#allocation5 + $0x160] sm:$0xff]
    %v213 = vld [vmem:[#allocation5 + $0x168] sm:$0xff]
    %v214 = vld [vmem:[#allocation5 + $0x170] sm:$0xff]
    %v215 = vld [vmem:[#allocation5 + $0x178] sm:$0xff]
    %v216 = vld [vmem:[#allocation5 + $0x180] sm:$0xff]
    %v217 = vld [vmem:[#allocation5 + $0x188] sm:$0xff]
    %v218 = vld [vmem:[#allocation5 + $0x190] sm:$0xff]
    %v219 = vld [vmem:[#allocation5 + $0x198] sm:$0xff]
    %v220 = vld [vmem:[#allocation5 + $0x1a0] sm:$0xff]
    %v221 = vld [vmem:[#allocation5 + $0x1a8] sm:$0xff]
    %v222 = vld [vmem:[#allocation5 + $0x1b0] sm:$0xff]
    %v223 = vld [vmem:[#allocation5 + $0x1b8] sm:$0xff]
    %v224 = vld [vmem:[#allocation5 + $0x1c0] sm:$0xff]
    %v225 = vld [vmem:[#allocation5 + $0x1c8] sm:$0xff]
    %v226 = vld [vmem:[#allocation5 + $0x1d0] sm:$0xff]
    %v227 = vld [vmem:[#allocation5 + $0x1d8] sm:$0xff]
    %v228 = vld [vmem:[#allocation5 + $0x1e0] sm:$0xff]
    %v229 = vld [vmem:[#allocation5 + $0x1e8] sm:$0xff]
    %v230 = vld [vmem:[#allocation5 + $0x1f0] sm:$0xff]
    %v231 = vld [vmem:[#allocation5 + $0x1f8] sm:$0xff]
    %v232 = vld [vmem:[#allocation7] sm:$0xf]
    %v233 = vld [vmem:[#allocation7 + $0x4] sm:$0xf]
    %v234 = vld [vmem:[#allocation7 + $0x8] sm:$0xf]
    %v235 = vld [vmem:[#allocation7 + $0xc] sm:$0xf]
    %v236 = vld [vmem:[#allocation7 + $0x10] sm:$0xf]
    %v237 = vld [vmem:[#allocation7 + $0x14] sm:$0xf]
    %v238 = vld [vmem:[#allocation7 + $0x18] sm:$0xf]
    %v239 = vld [vmem:[#allocation7 + $0x1c] sm:$0xf]
    %v240 = vld [vmem:[#allocation7 + $0x20] sm:$0xf]
    %v241 = vld [vmem:[#allocation7 + $0x24] sm:$0xf]
    %v242 = vld [vmem:[#allocation7 + $0x28] sm:$0xf]
    %v243 = vld [vmem:[#allocation7 + $0x2c] sm:$0xf]
    %v244 = vld [vmem:[#allocation7 + $0x30] sm:$0xf]
    %v245 = vld [vmem:[#allocation7 + $0x34] sm:$0xf]
    %v246 = vld [vmem:[#allocation7 + $0x38] sm:$0xf]
    %v247 = vld [vmem:[#allocation7 + $0x3c] sm:$0xf]
    %v248 = vld [vmem:[#allocation7 + $0x40] sm:$0xf]
    %v249 = vld [vmem:[#allocation7 + $0x44] sm:$0xf]
    %v250 = vld [vmem:[#allocation7 + $0x48] sm:$0xf]
    %v251 = vld [vmem:[#allocation7 + $0x4c] sm:$0xf]
    %v252 = vld [vmem:[#allocation7 + $0x50] sm:$0xf]
    %v253 = vld [vmem:[#allocation7 + $0x54] sm:$0xf]
    %v254 = vld [vmem:[#allocation7 + $0x58] sm:$0xf]
    %v255 = vld [vmem:[#allocation7 + $0x5c] sm:$0xf]
    %v256 = vld [vmem:[#allocation7 + $0x60] sm:$0xf]
    %v257 = vld [vmem:[#allocation7 + $0x64] sm:$0xf]
    %v258 = vld [vmem:[#allocation7 + $0x68] sm:$0xf]
    %v259 = vld [vmem:[#allocation7 + $0x6c] sm:$0xf]
    %v260 = vld [vmem:[#allocation7 + $0x70] sm:$0xf]
    %v261 = vld [vmem:[#allocation7 + $0x74] sm:$0xf]
    %v262 = vld [vmem:[#allocation7 + $0x78] sm:$0xf]
    %v263 = vld [vmem:[#allocation7 + $0x7c] sm:$0xf]
    %v264 = vld [vmem:[#allocation8] sm:$0xff]
    %v265 = vld [vmem:[#allocation8 + $0x8] sm:$0xff]
    %v266 = vld [vmem:[#allocation8 + $0x10] sm:$0xff]
    %v267 = vld [vmem:[#allocation8 + $0x18] sm:$0xff]
    %v268 = vld [vmem:[#allocation8 + $0x20] sm:$0xff]
    %v269 = vld [vmem:[#allocation8 + $0x28] sm:$0xff]
    %v270 = vld [vmem:[#allocation8 + $0x30] sm:$0xff]
    %v271 = vld [vmem:[#allocation8 + $0x38] sm:$0xff]
    %v272 = vld [vmem:[#allocation8 + $0x40] sm:$0xff]
    %v273 = vld [vmem:[#allocation8 + $0x48] sm:$0xff]
    %v274 = vld [vmem:[#allocation8 + $0x50] sm:$0xff]
    %v275 = vld [vmem:[#allocation8 + $0x58] sm:$0xff]
    %v276 = vld [vmem:[#allocation8 + $0x60] sm:$0xff]
    %v277 = vld [vmem:[#allocation8 + $0x68] sm:$0xff]
    %v278 = vld [vmem:[#allocation8 + $0x70] sm:$0xff]
    %v279 = vld [vmem:[#allocation8 + $0x78] sm:$0xff]
    %v280 = vld [vmem:[#allocation8 + $0x80] sm:$0xff]
    %v281 = vld [vmem:[#allocation8 + $0x88] sm:$0xff]
    %v282 = vld [vmem:[#allocation8 + $0x90] sm:$0xff]
    %v283 = vld [vmem:[#allocation8 + $0x98] sm:$0xff]
    %v284 = vld [vmem:[#allocation8 + $0xa0] sm:$0xff]
    %v285 = vld [vmem:[#allocation8 + $0xa8] sm:$0xff]
    %v286 = vld [vmem:[#allocation8 + $0xb0] sm:$0xff]
    %v287 = vld [vmem:[#allocation8 + $0xb8] sm:$0xff]
    %v288 = vld [vmem:[#allocation8 + $0xc0] sm:$0xff]
    %v289 = vld [vmem:[#allocation8 + $0xc8] sm:$0xff]
    %v290 = vld [vmem:[#allocation8 + $0xd0] sm:$0xff]
    %v291 = vld [vmem:[#allocation8 + $0xd8] sm:$0xff]
    %v292 = vld [vmem:[#allocation8 + $0xe0] sm:$0xff]
    %v293 = vld [vmem:[#allocation8 + $0xe8] sm:$0xff]
    %v294 = vld [vmem:[#allocation8 + $0xf0] sm:$0xff]
    %v295 = vld [vmem:[#allocation8 + $0xf8] sm:$0xff]
    %v296 = vld [vmem:[#allocation8 + $0x100] sm:$0xff]
    %v297 = vld [vmem:[#allocation8 + $0x108] sm:$0xff]
    %v298 = vld [vmem:[#allocation8 + $0x110] sm:$0xff]
    %v299 = vld [vmem:[#allocation8 + $0x118] sm:$0xff]
    %v300 = vld [vmem:[#allocation8 + $0x120] sm:$0xff]
    %v301 = vld [vmem:[#allocation8 + $0x128] sm:$0xff]
    %v302 = vld [vmem:[#allocation8 + $0x130] sm:$0xff]
    %v303 = vld [vmem:[#allocation8 + $0x138] sm:$0xff]
    %v304 = vld [vmem:[#allocation8 + $0x140] sm:$0xff]
    %v305 = vld [vmem:[#allocation8 + $0x148] sm:$0xff]
    %v306 = vld [vmem:[#allocation8 + $0x150] sm:$0xff]
    %v307 = vld [vmem:[#allocation8 + $0x158] sm:$0xff]
    %v308 = vld [vmem:[#allocation8 + $0x160] sm:$0xff]
    %v309 = vld [vmem:[#allocation8 + $0x168] sm:$0xff]
    %v310 = vld [vmem:[#allocation8 + $0x170] sm:$0xff]
    %v311 = vld [vmem:[#allocation8 + $0x178] sm:$0xff]
    %v312 = vld [vmem:[#allocation8 + $0x180] sm:$0xff]
    %v313 = vld [vmem:[#allocation8 + $0x188] sm:$0xff]
    %v314 = vld [vmem:[#allocation8 + $0x190] sm:$0xff]
    %v315 = vld [vmem:[#allocation8 + $0x198] sm:$0xff]
    %v316 = vld [vmem:[#allocation8 + $0x1a0] sm:$0xff]
    %v317 = vld [vmem:[#allocation8 + $0x1a8] sm:$0xff]
    %v318 = vld [vmem:[#allocation8 + $0x1b0] sm:$0xff]
    %v319 = vld [vmem:[#allocation8 + $0x1b8] sm:$0xff]
    %v320 = vld [vmem:[#allocation8 + $0x1c0] sm:$0xff]
    %v321 = vld [vmem:[#allocation8 + $0x1c8] sm:$0xff]
    %v322 = vld [vmem:[#allocation8 + $0x1d0] sm:$0xff]
    %v323 = vld [vmem:[#allocation8 + $0x1d8] sm:$0xff]
    %v324 = vld [vmem:[#allocation8 + $0x1e0] sm:$0xff]
    %v325 = vld [vmem:[#allocation8 + $0x1e8] sm:$0xff]
    %v326 = vld [vmem:[#allocation8 + $0x1f0] sm:$0xff]
    %v327 = vld [vmem:[#allocation8 + $0x1f8] sm:$0xff]
    %v328 = vld [vmem:[#allocation10] sm:$0xf]
    %v329 = vld [vmem:[#allocation10 + $0x4] sm:$0xf]
    %v330 = vld [vmem:[#allocation10 + $0x8] sm:$0xf]
    %v331 = vld [vmem:[#allocation10 + $0xc] sm:$0xf]
    %v332 = vld [vmem:[#allocation10 + $0x10] sm:$0xf]
    %v333 = vld [vmem:[#allocation10 + $0x14] sm:$0xf]
    %v334 = vld [vmem:[#allocation10 + $0x18] sm:$0xf]
    %v335 = vld [vmem:[#allocation10 + $0x1c] sm:$0xf]
    %v336 = vld [vmem:[#allocation10 + $0x20] sm:$0xf]
    %v337 = vld [vmem:[#allocation10 + $0x24] sm:$0xf]
    %v338 = vld [vmem:[#allocation10 + $0x28] sm:$0xf]
    %v339 = vld [vmem:[#allocation10 + $0x2c] sm:$0xf]
    %v340 = vld [vmem:[#allocation10 + $0x30] sm:$0xf]
    %v341 = vld [vmem:[#allocation10 + $0x34] sm:$0xf]
    %v342 = vld [vmem:[#allocation10 + $0x38] sm:$0xf]
    %v343 = vld [vmem:[#allocation10 + $0x3c] sm:$0xf]
    %v344 = vld [vmem:[#allocation10 + $0x40] sm:$0xf]
    %v345 = vld [vmem:[#allocation10 + $0x44] sm:$0xf]
    %v346 = vld [vmem:[#allocation10 + $0x48] sm:$0xf]
    %v347 = vld [vmem:[#allocation10 + $0x4c] sm:$0xf]
    %v348 = vld [vmem:[#allocation10 + $0x50] sm:$0xf]
    %v349 = vld [vmem:[#allocation10 + $0x54] sm:$0xf]
    %v350 = vld [vmem:[#allocation10 + $0x58] sm:$0xf]
    %v351 = vld [vmem:[#allocation10 + $0x5c] sm:$0xf]
    %v352 = vld [vmem:[#allocation10 + $0x60] sm:$0xf]
    %v353 = vld [vmem:[#allocation10 + $0x64] sm:$0xf]
    %v354 = vld [vmem:[#allocation10 + $0x68] sm:$0xf]
    %v355 = vld [vmem:[#allocation10 + $0x6c] sm:$0xf]
    %v356 = vld [vmem:[#allocation10 + $0x70] sm:$0xf]
    %v357 = vld [vmem:[#allocation10 + $0x74] sm:$0xf]
    %v358 = vld [vmem:[#allocation10 + $0x78] sm:$0xf]
    %v359 = vld [vmem:[#allocation10 + $0x7c] sm:$0xf]
    %v360 = vld [vmem:[#allocation11] sm:$0xf]
    %v361 = vld [vmem:[#allocation11 + $0x4] sm:$0xf]
    %v362 = vld [vmem:[#allocation11 + $0x8] sm:$0xf]
    %v363 = vld [vmem:[#allocation11 + $0xc] sm:$0xf]
    %v364 = vld [vmem:[#allocation11 + $0x10] sm:$0xf]
    %v365 = vld [vmem:[#allocation11 + $0x14] sm:$0xf]
    %v366 = vld [vmem:[#allocation11 + $0x18] sm:$0xf]
    %v367 = vld [vmem:[#allocation11 + $0x1c] sm:$0xf]
    %v368 = vld [vmem:[#allocation11 + $0x20] sm:$0xf]
    %v369 = vld [vmem:[#allocation11 + $0x24] sm:$0xf]
    %v370 = vld [vmem:[#allocation11 + $0x28] sm:$0xf]
    %v371 = vld [vmem:[#allocation11 + $0x2c] sm:$0xf]
    %v372 = vld [vmem:[#allocation11 + $0x30] sm:$0xf]
    %v373 = vld [vmem:[#allocation11 + $0x34] sm:$0xf]
    %v374 = vld [vmem:[#allocation11 + $0x38] sm:$0xf]
    %v375 = vld [vmem:[#allocation11 + $0x3c] sm:$0xf]
    %v376 = vld [vmem:[#allocation13] sm:$0xf]
    %v377 = vld [vmem:[#allocation13 + $0x4] sm:$0xf]
    %v378 = vld [vmem:[#allocation13 + $0x8] sm:$0xf]
    %v379 = vld [vmem:[#allocation13 + $0xc] sm:$0xf]
    %v380 = vld [vmem:[#allocation13 + $0x10] sm:$0xf]
    %v381 = vld [vmem:[#allocation13 + $0x14] sm:$0xf]
    %v382 = vld [vmem:[#allocation13 + $0x18] sm:$0xf]
    %v383 = vld [vmem:[#allocation13 + $0x1c] sm:$0xf]
    %v384 = vld [vmem:[#allocation13 + $0x20] sm:$0xf]
    %v385 = vld [vmem:[#allocation13 + $0x24] sm:$0xf]
    %v386 = vld [vmem:[#allocation13 + $0x28] sm:$0xf]
    %v387 = vld [vmem:[#allocation13 + $0x2c] sm:$0xf]
    %v388 = vld [vmem:[#allocation13 + $0x30] sm:$0xf]
    %v389 = vld [vmem:[#allocation13 + $0x34] sm:$0xf]
    %v390 = vld [vmem:[#allocation13 + $0x38] sm:$0xf]
    %v391 = vld [vmem:[#allocation13 + $0x3c] sm:$0xf]
    %v392 = vld [vmem:[#allocation14] sm:$0xf]
    %v393 = vld [vmem:[#allocation14 + $0x4] sm:$0xf]
    %v394 = vld [vmem:[#allocation14 + $0x8] sm:$0xf]
    %v395 = vld [vmem:[#allocation14 + $0xc] sm:$0xf]
    %v396 = vld [vmem:[#allocation14 + $0x10] sm:$0xf]
    %v397 = vld [vmem:[#allocation14 + $0x14] sm:$0xf]
    %v398 = vld [vmem:[#allocation14 + $0x18] sm:$0xf]
    %v399 = vld [vmem:[#allocation14 + $0x1c] sm:$0xf]
    %v400 = vld [vmem:[#allocation14 + $0x20] sm:$0xf]
    %v401 = vld [vmem:[#allocation14 + $0x24] sm:$0xf]
    %v402 = vld [vmem:[#allocation14 + $0x28] sm:$0xf]
    %v403 = vld [vmem:[#allocation14 + $0x2c] sm:$0xf]
    %v404 = vld [vmem:[#allocation14 + $0x30] sm:$0xf]
    %v405 = vld [vmem:[#allocation14 + $0x34] sm:$0xf]
    %v406 = vld [vmem:[#allocation14 + $0x38] sm:$0xf]
    %v407 = vld [vmem:[#allocation14 + $0x3c] sm:$0xf]
    %v408 = vld [vmem:[#allocation16] sm:$0xf]
    %v409 = vld [vmem:[#allocation16 + $0x4] sm:$0xf]
    %v410 = vld [vmem:[#allocation16 + $0x8] sm:$0xf]
    %v411 = vld [vmem:[#allocation16 + $0xc] sm:$0xf]
    %v412 = vld [vmem:[#allocation16 + $0x10] sm:$0xf]
    %v413 = vld [vmem:[#allocation16 + $0x14] sm:$0xf]
    %v414 = vld [vmem:[#allocation16 + $0x18] sm:$0xf]
    %v415 = vld [vmem:[#allocation16 + $0x1c] sm:$0xf]
    %v416 = vld [vmem:[#allocation16 + $0x20] sm:$0xf]
    %v417 = vld [vmem:[#allocation16 + $0x24] sm:$0xf]
    %v418 = vld [vmem:[#allocation16 + $0x28] sm:$0xf]
    %v419 = vld [vmem:[#allocation16 + $0x2c] sm:$0xf]
    %v420 = vld [vmem:[#allocation16 + $0x30] sm:$0xf]
    %v421 = vld [vmem:[#allocation16 + $0x34] sm:$0xf]
    %v422 = vld [vmem:[#allocation16 + $0x38] sm:$0xf]
    %v423 = vld [vmem:[#allocation16 + $0x3c] sm:$0xf]
    %v424 = vld [vmem:[%s10] sm:$0xf]
    %v425 = vld [vmem:[%s10 + $0x4] sm:$0xf]
    %v426 = vld [vmem:[%s10 + $0x8] sm:$0xf]
    %v427 = vld [vmem:[%s10 + $0xc] sm:$0xf]
    %v428 = vld [vmem:[%s10 + $0x10] sm:$0xf]
    %v429 = vld [vmem:[%s10 + $0x14] sm:$0xf]
    %v430 = vld [vmem:[%s10 + $0x18] sm:$0xf]
    %v431 = vld [vmem:[%s10 + $0x1c] sm:$0xf]
    %v432 = vld [vmem:[%s10 + $0x20] sm:$0xf]
    %v433 = vld [vmem:[%s10 + $0x24] sm:$0xf]
    %v434 = vld [vmem:[%s10 + $0x28] sm:$0xf]
    %v435 = vld [vmem:[%s10 + $0x2c] sm:$0xf]
    %v436 = vld [vmem:[%s10 + $0x30] sm:$0xf]
    %v437 = vld [vmem:[%s10 + $0x34] sm:$0xf]
    %v438 = vld [vmem:[%s10 + $0x38] sm:$0xf]
    %v439 = vld [vmem:[%s10 + $0x3c] sm:$0xf]
    %v440 = vld [vmem:[%s11] sm:$0xf]
    %v441 = vld [vmem:[%s11 + $0x4] sm:$0xf]
    %v442 = vld [vmem:[%s11 + $0x8] sm:$0xf]
    %v443 = vld [vmem:[%s11 + $0xc] sm:$0xf]
    %v444 = vld [vmem:[%s11 + $0x10] sm:$0xf]
    %v445 = vld [vmem:[%s11 + $0x14] sm:$0xf]
    %v446 = vld [vmem:[%s11 + $0x18] sm:$0xf]
    %v447 = vld [vmem:[%s11 + $0x1c] sm:$0xf]
    %v448 = vld [vmem:[%s0] sm:$0xff]
    %v449 = vld [vmem:[%s0 + $0x8] sm:$0xff]
    %v450 = vld [vmem:[%s0 + $0x10] sm:$0xff]
    %v451 = vld [vmem:[%s0 + $0x18] sm:$0xff]
    %v452 = vld [vmem:[%s0 + $0x20] sm:$0xff]
    %v453 = vld [vmem:[%s0 + $0x28] sm:$0xff]
    %v454 = vld [vmem:[%s0 + $0x30] sm:$0xff]
    %v455 = vld [vmem:[%s0 + $0x38] sm:$0xff]
    %v456 = vld [vmem:[#allocation2] sm:$0xff]
    %v457 = vld [vmem:[#allocation2 + $0x8] sm:$0xff]
    %v458 = vld [vmem:[#allocation2 + $0x10] sm:$0xff]
    %v459 = vld [vmem:[#allocation2 + $0x18] sm:$0xff]
    %v460 = vld [vmem:[#allocation2 + $0x20] sm:$0xff]
    %v461 = vld [vmem:[#allocation2 + $0x28] sm:$0xff]
    %v462 = vld [vmem:[#allocation2 + $0x30] sm:$0xff]
    %v463 = vld [vmem:[#allocation2 + $0x38] sm:$0xff]
    %v464 = vld [vmem:[%s12] sm:$0x3]
    %v465 = vpack.c.bf16 %v452, %v448
    %v466 = vpack.c.bf16 %v453, %v449
    %v467 = vpack.c.bf16 %v454, %v450
    %v468 = vpack.c.bf16 %v455, %v451
    %v470 = vlaneseq
    %v471 = vshrl.u32 %v470, 7
    %v472 = vsub.s32 0, %v471
    %v473 = vrot.slane %v464, %v472
    %v474 = vlaneseq
    %v475 = vshrl.u32 %v474, 7
    %v476 = vsub.s32 1, %v475
    %v477 = vrot.slane %v464, %v476
    %v544 = vunpack.c.l.b16 %v168
    %v545 = vunpack.c.h.b16 %v168
    %v546 = vunpack.c.l.b16 %v169
    %v547 = vunpack.c.h.b16 %v169
    %v548 = vunpack.c.l.b16 %v170
    %v549 = vunpack.c.h.b16 %v170
    %v550 = vunpack.c.l.b16 %v171
    %v551 = vunpack.c.h.b16 %v171
    %v552 = vunpack.c.l.b16 %v172
    %v553 = vunpack.c.h.b16 %v172
    %v554 = vunpack.c.l.b16 %v173
    %v555 = vunpack.c.h.b16 %v173
    %v556 = vunpack.c.l.b16 %v174
    %v557 = vunpack.c.h.b16 %v174
    %v558 = vunpack.c.l.b16 %v175
    %v559 = vunpack.c.h.b16 %v175
    %v560 = vunpack.c.l.b16 %v176
    %v561 = vunpack.c.h.b16 %v176
    %v562 = vunpack.c.l.b16 %v177
    %v563 = vunpack.c.h.b16 %v177
    %v564 = vunpack.c.l.b16 %v178
    %v565 = vunpack.c.h.b16 %v178
    %v566 = vunpack.c.l.b16 %v179
    %v567 = vunpack.c.h.b16 %v179
    %v568 = vunpack.c.l.b16 %v180
    %v569 = vunpack.c.h.b16 %v180
    %v570 = vunpack.c.l.b16 %v181
    %v571 = vunpack.c.h.b16 %v181
    %v572 = vunpack.c.l.b16 %v182
    %v573 = vunpack.c.h.b16 %v182
    %v574 = vunpack.c.l.b16 %v183
    %v575 = vunpack.c.h.b16 %v183
    %v576 = vunpack.c.l.b16 %v184
    %v577 = vunpack.c.h.b16 %v184
    %v578 = vunpack.c.l.b16 %v185
    %v579 = vunpack.c.h.b16 %v185
    %v580 = vunpack.c.l.b16 %v186
    %v581 = vunpack.c.h.b16 %v186
    %v582 = vunpack.c.l.b16 %v187
    %v583 = vunpack.c.h.b16 %v187
    %v584 = vunpack.c.l.b16 %v188
    %v585 = vunpack.c.h.b16 %v188
    %v586 = vunpack.c.l.b16 %v189
    %v587 = vunpack.c.h.b16 %v189
    %v588 = vunpack.c.l.b16 %v190
    %v589 = vunpack.c.h.b16 %v190
    %v590 = vunpack.c.l.b16 %v191
    %v591 = vunpack.c.h.b16 %v191
    %v592 = vunpack.c.l.b16 %v192
    %v593 = vunpack.c.h.b16 %v192
    %v594 = vunpack.c.l.b16 %v193
    %v595 = vunpack.c.h.b16 %v193
    %v596 = vunpack.c.l.b16 %v194
    %v597 = vunpack.c.h.b16 %v194
    %v598 = vunpack.c.l.b16 %v195
    %v599 = vunpack.c.h.b16 %v195
    %v600 = vunpack.c.l.b16 %v196
    %v601 = vunpack.c.h.b16 %v196
    %v602 = vunpack.c.l.b16 %v197
    %v603 = vunpack.c.h.b16 %v197
    %v604 = vunpack.c.l.b16 %v198
    %v605 = vunpack.c.h.b16 %v198
    %v606 = vunpack.c.l.b16 %v199
    %v607 = vunpack.c.h.b16 %v199
    %v608 = vunpack.c.l.b16 %v200
    %v609 = vunpack.c.h.b16 %v200
    %v610 = vunpack.c.l.b16 %v201
    %v611 = vunpack.c.h.b16 %v201
    %v612 = vunpack.c.l.b16 %v202
    %v613 = vunpack.c.h.b16 %v202
    %v614 = vunpack.c.l.b16 %v203
    %v615 = vunpack.c.h.b16 %v203
    %v616 = vunpack.c.l.b16 %v204
    %v617 = vunpack.c.h.b16 %v204
    %v618 = vunpack.c.l.b16 %v205
    %v619 = vunpack.c.h.b16 %v205
    %v620 = vunpack.c.l.b16 %v206
    %v621 = vunpack.c.h.b16 %v206
    %v622 = vunpack.c.l.b16 %v207
    %v623 = vunpack.c.h.b16 %v207
    %v624 = vunpack.c.l.b16 %v208
    %v625 = vunpack.c.h.b16 %v208
    %v626 = vunpack.c.l.b16 %v209
    %v627 = vunpack.c.h.b16 %v209
    %v628 = vunpack.c.l.b16 %v210
    %v629 = vunpack.c.h.b16 %v210
    %v630 = vunpack.c.l.b16 %v211
    %v631 = vunpack.c.h.b16 %v211
    %v632 = vunpack.c.l.b16 %v212
    %v633 = vunpack.c.h.b16 %v212
    %v634 = vunpack.c.l.b16 %v213
    %v635 = vunpack.c.h.b16 %v213
    %v636 = vunpack.c.l.b16 %v214
    %v637 = vunpack.c.h.b16 %v214
    %v638 = vunpack.c.l.b16 %v215
    %v639 = vunpack.c.h.b16 %v215
    %v640 = vunpack.c.l.b16 %v216
    %v641 = vunpack.c.h.b16 %v216
    %v642 = vunpack.c.l.b16 %v217
    %v643 = vunpack.c.h.b16 %v217
    %v644 = vunpack.c.l.b16 %v218
    %v645 = vunpack.c.h.b16 %v218
    %v646 = vunpack.c.l.b16 %v219
    %v647 = vunpack.c.h.b16 %v219
    %v648 = vunpack.c.l.b16 %v220
    %v649 = vunpack.c.h.b16 %v220
    %v650 = vunpack.c.l.b16 %v221
    %v651 = vunpack.c.h.b16 %v221
    %v652 = vunpack.c.l.b16 %v222
    %v653 = vunpack.c.h.b16 %v222
    %v654 = vunpack.c.l.b16 %v223
    %v655 = vunpack.c.h.b16 %v223
    %v656 = vunpack.c.l.b16 %v224
    %v657 = vunpack.c.h.b16 %v224
    %v658 = vunpack.c.l.b16 %v225
    %v659 = vunpack.c.h.b16 %v225
    %v660 = vunpack.c.l.b16 %v226
    %v661 = vunpack.c.h.b16 %v226
    %v662 = vunpack.c.l.b16 %v227
    %v663 = vunpack.c.h.b16 %v227
    %v664 = vunpack.c.l.b16 %v228
    %v665 = vunpack.c.h.b16 %v228
    %v666 = vunpack.c.l.b16 %v229
    %v667 = vunpack.c.h.b16 %v229
    %v668 = vunpack.c.l.b16 %v230
    %v669 = vunpack.c.h.b16 %v230
    %v670 = vunpack.c.l.b16 %v231
    %v671 = vunpack.c.h.b16 %v231
    %v672 = vpack.c.b16 %v546, %v544
    %v673 = vpack.c.b16 %v547, %v545
    %v674 = vpack.c.b16 %v550, %v548
    %v675 = vpack.c.b16 %v551, %v549
    %v676 = vpack.c.b16 %v554, %v552
    %v677 = vpack.c.b16 %v555, %v553
    %v678 = vpack.c.b16 %v558, %v556
    %v679 = vpack.c.b16 %v559, %v557
    %v680 = vpack.c.b16 %v562, %v560
    %v681 = vpack.c.b16 %v563, %v561
    %v682 = vpack.c.b16 %v566, %v564
    %v683 = vpack.c.b16 %v567, %v565
    %v684 = vpack.c.b16 %v570, %v568
    %v685 = vpack.c.b16 %v571, %v569
    %v686 = vpack.c.b16 %v574, %v572
    %v687 = vpack.c.b16 %v575, %v573
    %v688 = vpack.c.b16 %v578, %v576
    %v689 = vpack.c.b16 %v579, %v577
    %v690 = vpack.c.b16 %v582, %v580
    %v691 = vpack.c.b16 %v583, %v581
    %v692 = vpack.c.b16 %v586, %v584
    %v693 = vpack.c.b16 %v587, %v585
    %v694 = vpack.c.b16 %v590, %v588
    %v695 = vpack.c.b16 %v591, %v589
    %v696 = vpack.c.b16 %v594, %v592
    %v697 = vpack.c.b16 %v595, %v593
    %v698 = vpack.c.b16 %v598, %v596
    %v699 = vpack.c.b16 %v599, %v597
    %v700 = vpack.c.b16 %v602, %v600
    %v701 = vpack.c.b16 %v603, %v601
    %v702 = vpack.c.b16 %v606, %v604
    %v703 = vpack.c.b16 %v607, %v605
    %v704 = vpack.c.b16 %v610, %v608
    %v705 = vpack.c.b16 %v611, %v609
    %v706 = vpack.c.b16 %v614, %v612
    %v707 = vpack.c.b16 %v615, %v613
    %v708 = vpack.c.b16 %v618, %v616
    %v709 = vpack.c.b16 %v619, %v617
    %v710 = vpack.c.b16 %v622, %v620
    %v711 = vpack.c.b16 %v623, %v621
    %v712 = vpack.c.b16 %v626, %v624
    %v713 = vpack.c.b16 %v627, %v625
    %v714 = vpack.c.b16 %v630, %v628
    %v715 = vpack.c.b16 %v631, %v629
    %v716 = vpack.c.b16 %v634, %v632
    %v717 = vpack.c.b16 %v635, %v633
    %v718 = vpack.c.b16 %v638, %v636
    %v719 = vpack.c.b16 %v639, %v637
    %v720 = vpack.c.b16 %v642, %v640
    %v721 = vpack.c.b16 %v643, %v641
    %v722 = vpack.c.b16 %v646, %v644
    %v723 = vpack.c.b16 %v647, %v645
    %v724 = vpack.c.b16 %v650, %v648
    %v725 = vpack.c.b16 %v651, %v649
    %v726 = vpack.c.b16 %v654, %v652
    %v727 = vpack.c.b16 %v655, %v653
    %v728 = vpack.c.b16 %v658, %v656
    %v729 = vpack.c.b16 %v659, %v657
    %v730 = vpack.c.b16 %v662, %v660
    %v731 = vpack.c.b16 %v663, %v661
    %v732 = vpack.c.b16 %v666, %v664
    %v733 = vpack.c.b16 %v667, %v665
    %v734 = vpack.c.b16 %v670, %v668
    %v735 = vpack.c.b16 %v671, %v669
    %800 = vmatprep.subr.bf16.mxu0 %v687
    %801 = vmatpush1.bf16.msra.mxu0 %v686
    %802 = vmatprep.subr.bf16.mxu0 %v685
    %803 = vmatpush1.bf16.msra.mxu0 %v684
    %804 = vmatprep.subr.bf16.mxu0 %v683
    %805 = vmatpush1.bf16.msra.mxu0 %v682
    %806 = vmatprep.subr.bf16.mxu0 %v681
    %807 = vmatpush1.bf16.msra.mxu0 %v680
    %808 = vmatprep.subr.bf16.mxu0 %v679
    %809 = vmatpush1.bf16.msra.mxu0 %v678
    %810 = vmatprep.subr.bf16.mxu0 %v677
    %811 = vmatpush1.bf16.msra.mxu0 %v676
    %812 = vmatprep.subr.bf16.mxu0 %v675
    %813 = vmatpush1.bf16.msra.mxu0 %v674
    %814 = vmatprep.subr.bf16.mxu0 %v673
    %815 = vmatpush1.bf16.msra.mxu0 %v672
    %816 = vmatprep.subr.bf16.mxu0 %v703
    %817 = vmatpush2.bf16.msra.mxu0 %v702
    %818 = vmatprep.subr.bf16.mxu0 %v701
    %819 = vmatpush2.bf16.msra.mxu0 %v700
    %820 = vmatprep.subr.bf16.mxu0 %v699
    %821 = vmatpush2.bf16.msra.mxu0 %v698
    %822 = vmatprep.subr.bf16.mxu0 %v697
    %823 = vmatpush2.bf16.msra.mxu0 %v696
    %824 = vmatprep.subr.bf16.mxu0 %v695
    %825 = vmatpush2.bf16.msra.mxu0 %v694
    %826 = vmatprep.subr.bf16.mxu0 %v693
    %827 = vmatpush2.bf16.msra.mxu0 %v692
    %828 = vmatprep.subr.bf16.mxu0 %v691
    %829 = vmatpush2.bf16.msra.mxu0 %v690
    %830 = vmatprep.subr.bf16.mxu0 %v689
    %831 = vmatpush2.bf16.msra.mxu0 %v688
    %832 = vmatprep.mubr.bf16.mxu0 %v466
    %833 = vmatmul.mubr.bf16.gmra.mxu0 %v465
    %v834 = vpop.f32.mrf.mxu0
    %v835 = vadd.f32 %v473, %v834
    %v836 = vpop.f32.mrf.mxu0
    %v837 = vadd.f32 %v477, %v836
    %v838 = vpop.f32.mrf.mxu0
    %v839 = vadd.f32 %v473, %v838
    %v840 = vpop.f32.mrf.mxu0
    %v841 = vadd.f32 %v477, %v840
    %842 = vdwg.mxu0
    %843 = vmatprep.subr.bf16.mxu0 %v719
    %844 = vmatpush1.bf16.msra.mxu0 %v718
    %845 = vmatprep.subr.bf16.mxu0 %v717
    %846 = vmatpush1.bf16.msra.mxu0 %v716
    %847 = vmatprep.subr.bf16.mxu0 %v715
    %848 = vmatpush1.bf16.msra.mxu0 %v714
    %849 = vmatprep.subr.bf16.mxu0 %v713
    %850 = vmatpush1.bf16.msra.mxu0 %v712
    %851 = vmatprep.subr.bf16.mxu0 %v711
    %852 = vmatpush1.bf16.msra.mxu0 %v710
    %853 = vmatprep.subr.bf16.mxu0 %v709
    %854 = vmatpush1.bf16.msra.mxu0 %v708
    %855 = vmatprep.subr.bf16.mxu0 %v707
    %856 = vmatpush1.bf16.msra.mxu0 %v706
    %857 = vmatprep.subr.bf16.mxu0 %v705
    %858 = vmatpush1.bf16.msra.mxu0 %v704
    %859 = vmatprep.subr.bf16.mxu0 %v735
    %860 = vmatpush2.bf16.msra.mxu0 %v734
    %861 = vmatprep.subr.bf16.mxu0 %v733
    %862 = vmatpush2.bf16.msra.mxu0 %v732
    %863 = vmatprep.subr.bf16.mxu0 %v731
    %864 = vmatpush2.bf16.msra.mxu0 %v730
    %865 = vmatprep.subr.bf16.mxu0 %v729
    %866 = vmatpush2.bf16.msra.mxu0 %v728
    %867 = vmatprep.subr.bf16.mxu0 %v727
    %868 = vmatpush2.bf16.msra.mxu0 %v726
    %869 = vmatprep.subr.bf16.mxu0 %v725
    %870 = vmatpush2.bf16.msra.mxu0 %v724
    %871 = vmatprep.subr.bf16.mxu0 %v723
    %872 = vmatpush2.bf16.msra.mxu0 %v722
    %873 = vmatprep.subr.bf16.mxu0 %v721
    %874 = vmatpush2.bf16.msra.mxu0 %v720
    %875 = vmatprep.mubr.bf16.mxu0 %v468
    %876 = vmatmul.mubr.bf16.gmra.mxu0 %v467
    %v877 = vpop.f32.mrf.mxu0
    %v878 = vadd.f32 %v835, %v877
    %v879 = vpop.f32.mrf.mxu0
    %v880 = vadd.f32 %v837, %v879
    %v881 = vpop.f32.mrf.mxu0
    %v882 = vadd.f32 %v839, %v881
    %v883 = vpop.f32.mrf.mxu0
    %v884 = vadd.f32 %v841, %v883
    %885 = vdwg.mxu0
    %v886 = vmax.f32 %v878, 0.0
    %v887 = vmax.f32 %v880, 0.0
    %v888 = vmax.f32 %v882, 0.0
    %v889 = vmax.f32 %v884, 0.0
    %v890 = vld [vmem:[%s12 + $0x2] sm:$0x1]
    %v891 = vpack.c.bf16 %v888, %v886
    %v892 = vpack.c.bf16 %v889, %v887
    %v894 = vlaneseq
    %v895 = vshrl.u32 %v894, 7
    %v896 = vsub.s32 0, %v895
    %v897 = vrot.slane %v890, %v896
    %v931 = vunpack.c.l.b16 %v232
    %v932 = vunpack.c.l.b16 %v233
    %v933 = vunpack.c.l.b16 %v234
    %v934 = vunpack.c.l.b16 %v235
    %v935 = vunpack.c.l.b16 %v236
    %v936 = vunpack.c.l.b16 %v237
    %v937 = vunpack.c.l.b16 %v238
    %v938 = vunpack.c.l.b16 %v239
    %v939 = vunpack.c.l.b16 %v240
    %v940 = vunpack.c.l.b16 %v241
    %v941 = vunpack.c.l.b16 %v242
    %v942 = vunpack.c.l.b16 %v243
    %v943 = vunpack.c.l.b16 %v244
    %v944 = vunpack.c.l.b16 %v245
    %v945 = vunpack.c.l.b16 %v246
    %v946 = vunpack.c.l.b16 %v247
    %v947 = vunpack.c.l.b16 %v248
    %v948 = vunpack.c.l.b16 %v249
    %v949 = vunpack.c.l.b16 %v250
    %v950 = vunpack.c.l.b16 %v251
    %v951 = vunpack.c.l.b16 %v252
    %v952 = vunpack.c.l.b16 %v253
    %v953 = vunpack.c.l.b16 %v254
    %v954 = vunpack.c.l.b16 %v255
    %v955 = vunpack.c.l.b16 %v256
    %v956 = vunpack.c.l.b16 %v257
    %v957 = vunpack.c.l.b16 %v258
    %v958 = vunpack.c.l.b16 %v259
    %v959 = vunpack.c.l.b16 %v260
    %v960 = vunpack.c.l.b16 %v261
    %v961 = vunpack.c.l.b16 %v262
    %v962 = vunpack.c.l.b16 %v263
    %v963 = vpack.c.b16 %v932, %v931
    %v964 = vpack.c.b16 %v934, %v933
    %v965 = vpack.c.b16 %v936, %v935
    %v966 = vpack.c.b16 %v938, %v937
    %v967 = vpack.c.b16 %v940, %v939
    %v968 = vpack.c.b16 %v942, %v941
    %v969 = vpack.c.b16 %v944, %v943
    %v970 = vpack.c.b16 %v946, %v945
    %v971 = vpack.c.b16 %v948, %v947
    %v972 = vpack.c.b16 %v950, %v949
    %v973 = vpack.c.b16 %v952, %v951
    %v974 = vpack.c.b16 %v954, %v953
    %v975 = vpack.c.b16 %v956, %v955
    %v976 = vpack.c.b16 %v958, %v957
    %v977 = vpack.c.b16 %v960, %v959
    %v978 = vpack.c.b16 %v962, %v961
    %995 = vmatprep.subr.bf16.mxu0 0
    %996 = vmatpush1.bf16.msra.mxu0 %v970
    %997 = vmatprep.subr.bf16.mxu0 0
    %998 = vmatpush1.bf16.msra.mxu0 %v969
    %999 = vmatprep.subr.bf16.mxu0 0
    %1000 = vmatpush1.bf16.msra.mxu0 %v968
    %1001 = vmatprep.subr.bf16.mxu0 0
    %1002 = vmatpush1.bf16.msra.mxu0 %v967
    %1003 = vmatprep.subr.bf16.mxu0 0
    %1004 = vmatpush1.bf16.msra.mxu0 %v966
    %1005 = vmatprep.subr.bf16.mxu0 0
    %1006 = vmatpush1.bf16.msra.mxu0 %v965
    %1007 = vmatprep.subr.bf16.mxu0 0
    %1008 = vmatpush1.bf16.msra.mxu0 %v964
    %1009 = vmatprep.subr.bf16.mxu0 0
    %1010 = vmatpush1.bf16.msra.mxu0 %v963
    %1011 = vmatprep.subr.bf16.mxu0 0
    %1012 = vmatpush2.bf16.msra.mxu0 %v978
    %1013 = vmatprep.subr.bf16.mxu0 0
    %1014 = vmatpush2.bf16.msra.mxu0 %v977
    %1015 = vmatprep.subr.bf16.mxu0 0
    %1016 = vmatpush2.bf16.msra.mxu0 %v976
    %1017 = vmatprep.subr.bf16.mxu0 0
    %1018 = vmatpush2.bf16.msra.mxu0 %v975
    %1019 = vmatprep.subr.bf16.mxu0 0
    %1020 = vmatpush2.bf16.msra.mxu0 %v974
    %1021 = vmatprep.subr.bf16.mxu0 0
    %1022 = vmatpush2.bf16.msra.mxu0 %v973
    %1023 = vmatprep.subr.bf16.mxu0 0
    %1024 = vmatpush2.bf16.msra.mxu0 %v972
    %1025 = vmatprep.subr.bf16.mxu0 0
    %1026 = vmatpush2.bf16.msra.mxu0 %v971
    %1027 = vmatprep.mubr.bf16.mxu0 %v892
    %1028 = vmatmul.mubr.bf16.gmra.mxu0 %v891
    %v1029 = vpop.f32.mrf.mxu0
    %v1030 = vadd.f32 %v897, %v1029
    %v1031 = vpop.f32.mrf.mxu0
    %v1032 = vpop.f32.mrf.mxu0
    %v1033 = vadd.f32 %v897, %v1032
    %v1034 = vpop.f32.mrf.mxu0
    %1035 = vdwg.mxu0
    %v1036 = vmax.f32 %v1030, 0.0
    %v1037 = vmax.f32 %v1033, 0.0
    %v1038 = vld [vmem:[%s12 + $0x3] sm:$0x3]
    %v1039 = vpack.c.bf16 %v460, %v456
    %v1040 = vpack.c.bf16 %v461, %v457
    %v1041 = vpack.c.bf16 %v462, %v458
    %v1042 = vpack.c.bf16 %v463, %v459
    %v1044 = vlaneseq
    %v1045 = vshrl.u32 %v1044, 7
    %v1046 = vsub.s32 0, %v1045
    %v1047 = vrot.slane %v1038, %v1046
    %v1048 = vlaneseq
    %v1049 = vshrl.u32 %v1048, 7
    %v1050 = vsub.s32 1, %v1049
    %v1051 = vrot.slane %v1038, %v1050
    %v1118 = vunpack.c.l.b16 %v264
    %v1119 = vunpack.c.h.b16 %v264
    %v1120 = vunpack.c.l.b16 %v265
    %v1121 = vunpack.c.h.b16 %v265
    %v1122 = vunpack.c.l.b16 %v266
    %v1123 = vunpack.c.h.b16 %v266
    %v1124 = vunpack.c.l.b16 %v267
    %v1125 = vunpack.c.h.b16 %v267
    %v1126 = vunpack.c.l.b16 %v268
    %v1127 = vunpack.c.h.b16 %v268
    %v1128 = vunpack.c.l.b16 %v269
    %v1129 = vunpack.c.h.b16 %v269
    %v1130 = vunpack.c.l.b16 %v270
    %v1131 = vunpack.c.h.b16 %v270
    %v1132 = vunpack.c.l.b16 %v271
    %v1133 = vunpack.c.h.b16 %v271
    %v1134 = vunpack.c.l.b16 %v272
    %v1135 = vunpack.c.h.b16 %v272
    %v1136 = vunpack.c.l.b16 %v273
    %v1137 = vunpack.c.h.b16 %v273
    %v1138 = vunpack.c.l.b16 %v274
    %v1139 = vunpack.c.h.b16 %v274
    %v1140 = vunpack.c.l.b16 %v275
    %v1141 = vunpack.c.h.b16 %v275
    %v1142 = vunpack.c.l.b16 %v276
    %v1143 = vunpack.c.h.b16 %v276
    %v1144 = vunpack.c.l.b16 %v277
    %v1145 = vunpack.c.h.b16 %v277
    %v1146 = vunpack.c.l.b16 %v278
    %v1147 = vunpack.c.h.b16 %v278
    %v1148 = vunpack.c.l.b16 %v279
    %v1149 = vunpack.c.h.b16 %v279
    %v1150 = vunpack.c.l.b16 %v280
    %v1151 = vunpack.c.h.b16 %v280
    %v1152 = vunpack.c.l.b16 %v281
    %v1153 = vunpack.c.h.b16 %v281
    %v1154 = vunpack.c.l.b16 %v282
    %v1155 = vunpack.c.h.b16 %v282
    %v1156 = vunpack.c.l.b16 %v283
    %v1157 = vunpack.c.h.b16 %v283
    %v1158 = vunpack.c.l.b16 %v284
    %v1159 = vunpack.c.h.b16 %v284
    %v1160 = vunpack.c.l.b16 %v285
    %v1161 = vunpack.c.h.b16 %v285
    %v1162 = vunpack.c.l.b16 %v286
    %v1163 = vunpack.c.h.b16 %v286
    %v1164 = vunpack.c.l.b16 %v287
    %v1165 = vunpack.c.h.b16 %v287
    %v1166 = vunpack.c.l.b16 %v288
    %v1167 = vunpack.c.h.b16 %v288
    %v1168 = vunpack.c.l.b16 %v289
    %v1169 = vunpack.c.h.b16 %v289
    %v1170 = vunpack.c.l.b16 %v290
    %v1171 = vunpack.c.h.b16 %v290
    %v1172 = vunpack.c.l.b16 %v291
    %v1173 = vunpack.c.h.b16 %v291
    %v1174 = vunpack.c.l.b16 %v292
    %v1175 = vunpack.c.h.b16 %v292
    %v1176 = vunpack.c.l.b16 %v293
    %v1177 = vunpack.c.h.b16 %v293
    %v1178 = vunpack.c.l.b16 %v294
    %v1179 = vunpack.c.h.b16 %v294
    %v1180 = vunpack.c.l.b16 %v295
    %v1181 = vunpack.c.h.b16 %v295
    %v1182 = vunpack.c.l.b16 %v296
    %v1183 = vunpack.c.h.b16 %v296
    %v1184 = vunpack.c.l.b16 %v297
    %v1185 = vunpack.c.h.b16 %v297
    %v1186 = vunpack.c.l.b16 %v298
    %v1187 = vunpack.c.h.b16 %v298
    %v1188 = vunpack.c.l.b16 %v299
    %v1189 = vunpack.c.h.b16 %v299
    %v1190 = vunpack.c.l.b16 %v300
    %v1191 = vunpack.c.h.b16 %v300
    %v1192 = vunpack.c.l.b16 %v301
    %v1193 = vunpack.c.h.b16 %v301
    %v1194 = vunpack.c.l.b16 %v302
    %v1195 = vunpack.c.h.b16 %v302
    %v1196 = vunpack.c.l.b16 %v303
    %v1197 = vunpack.c.h.b16 %v303
    %v1198 = vunpack.c.l.b16 %v304
    %v1199 = vunpack.c.h.b16 %v304
    %v1200 = vunpack.c.l.b16 %v305
    %v1201 = vunpack.c.h.b16 %v305
    %v1202 = vunpack.c.l.b16 %v306
    %v1203 = vunpack.c.h.b16 %v306
    %v1204 = vunpack.c.l.b16 %v307
    %v1205 = vunpack.c.h.b16 %v307
    %v1206 = vunpack.c.l.b16 %v308
    %v1207 = vunpack.c.h.b16 %v308
    %v1208 = vunpack.c.l.b16 %v309
    %v1209 = vunpack.c.h.b16 %v309
    %v1210 = vunpack.c.l.b16 %v310
    %v1211 = vunpack.c.h.b16 %v310
    %v1212 = vunpack.c.l.b16 %v311
    %v1213 = vunpack.c.h.b16 %v311
    %v1214 = vunpack.c.l.b16 %v312
    %v1215 = vunpack.c.h.b16 %v312
    %v1216 = vunpack.c.l.b16 %v313
    %v1217 = vunpack.c.h.b16 %v313
    %v1218 = vunpack.c.l.b16 %v314
    %v1219 = vunpack.c.h.b16 %v314
    %v1220 = vunpack.c.l.b16 %v315
    %v1221 = vunpack.c.h.b16 %v315
    %v1222 = vunpack.c.l.b16 %v316
    %v1223 = vunpack.c.h.b16 %v316
    %v1224 = vunpack.c.l.b16 %v317
    %v1225 = vunpack.c.h.b16 %v317
    %v1226 = vunpack.c.l.b16 %v318
    %v1227 = vunpack.c.h.b16 %v318
    %v1228 = vunpack.c.l.b16 %v319
    %v1229 = vunpack.c.h.b16 %v319
    %v1230 = vunpack.c.l.b16 %v320
    %v1231 = vunpack.c.h.b16 %v320
    %v1232 = vunpack.c.l.b16 %v321
    %v1233 = vunpack.c.h.b16 %v321
    %v1234 = vunpack.c.l.b16 %v322
    %v1235 = vunpack.c.h.b16 %v322
    %v1236 = vunpack.c.l.b16 %v323
    %v1237 = vunpack.c.h.b16 %v323
    %v1238 = vunpack.c.l.b16 %v324
    %v1239 = vunpack.c.h.b16 %v324
    %v1240 = vunpack.c.l.b16 %v325
    %v1241 = vunpack.c.h.b16 %v325
    %v1242 = vunpack.c.l.b16 %v326
    %v1243 = vunpack.c.h.b16 %v326
    %v1244 = vunpack.c.l.b16 %v327
    %v1245 = vunpack.c.h.b16 %v327
    %v1246 = vpack.c.b16 %v1120, %v1118
    %v1247 = vpack.c.b16 %v1121, %v1119
    %v1248 = vpack.c.b16 %v1124, %v1122
    %v1249 = vpack.c.b16 %v1125, %v1123
    %v1250 = vpack.c.b16 %v1128, %v1126
    %v1251 = vpack.c.b16 %v1129, %v1127
    %v1252 = vpack.c.b16 %v1132, %v1130
    %v1253 = vpack.c.b16 %v1133, %v1131
    %v1254 = vpack.c.b16 %v1136, %v1134
    %v1255 = vpack.c.b16 %v1137, %v1135
    %v1256 = vpack.c.b16 %v1140, %v1138
    %v1257 = vpack.c.b16 %v1141, %v1139
    %v1258 = vpack.c.b16 %v1144, %v1142
    %v1259 = vpack.c.b16 %v1145, %v1143
    %v1260 = vpack.c.b16 %v1148, %v1146
    %v1261 = vpack.c.b16 %v1149, %v1147
    %v1262 = vpack.c.b16 %v1152, %v1150
    %v1263 = vpack.c.b16 %v1153, %v1151
    %v1264 = vpack.c.b16 %v1156, %v1154
    %v1265 = vpack.c.b16 %v1157, %v1155
    %v1266 = vpack.c.b16 %v1160, %v1158
    %v1267 = vpack.c.b16 %v1161, %v1159
    %v1268 = vpack.c.b16 %v1164, %v1162
    %v1269 = vpack.c.b16 %v1165, %v1163
    %v1270 = vpack.c.b16 %v1168, %v1166
    %v1271 = vpack.c.b16 %v1169, %v1167
    %v1272 = vpack.c.b16 %v1172, %v1170
    %v1273 = vpack.c.b16 %v1173, %v1171
    %v1274 = vpack.c.b16 %v1176, %v1174
    %v1275 = vpack.c.b16 %v1177, %v1175
    %v1276 = vpack.c.b16 %v1180, %v1178
    %v1277 = vpack.c.b16 %v1181, %v1179
    %v1278 = vpack.c.b16 %v1184, %v1182
    %v1279 = vpack.c.b16 %v1185, %v1183
    %v1280 = vpack.c.b16 %v1188, %v1186
    %v1281 = vpack.c.b16 %v1189, %v1187
    %v1282 = vpack.c.b16 %v1192, %v1190
    %v1283 = vpack.c.b16 %v1193, %v1191
    %v1284 = vpack.c.b16 %v1196, %v1194
    %v1285 = vpack.c.b16 %v1197, %v1195
    %v1286 = vpack.c.b16 %v1200, %v1198
    %v1287 = vpack.c.b16 %v1201, %v1199
    %v1288 = vpack.c.b16 %v1204, %v1202
    %v1289 = vpack.c.b16 %v1205, %v1203
    %v1290 = vpack.c.b16 %v1208, %v1206
    %v1291 = vpack.c.b16 %v1209, %v1207
    %v1292 = vpack.c.b16 %v1212, %v1210
    %v1293 = vpack.c.b16 %v1213, %v1211
    %v1294 = vpack.c.b16 %v1216, %v1214
    %v1295 = vpack.c.b16 %v1217, %v1215
    %v1296 = vpack.c.b16 %v1220, %v1218
    %v1297 = vpack.c.b16 %v1221, %v1219
    %v1298 = vpack.c.b16 %v1224, %v1222
    %v1299 = vpack.c.b16 %v1225, %v1223
    %v1300 = vpack.c.b16 %v1228, %v1226
    %v1301 = vpack.c.b16 %v1229, %v1227
    %v1302 = vpack.c.b16 %v1232, %v1230
    %v1303 = vpack.c.b16 %v1233, %v1231
    %v1304 = vpack.c.b16 %v1236, %v1234
    %v1305 = vpack.c.b16 %v1237, %v1235
    %v1306 = vpack.c.b16 %v1240, %v1238
    %v1307 = vpack.c.b16 %v1241, %v1239
    %v1308 = vpack.c.b16 %v1244, %v1242
    %v1309 = vpack.c.b16 %v1245, %v1243
    %1374 = vmatprep.subr.bf16.mxu0 %v1261
    %1375 = vmatpush1.bf16.msra.mxu0 %v1260
    %1376 = vmatprep.subr.bf16.mxu0 %v1259
    %1377 = vmatpush1.bf16.msra.mxu0 %v1258
    %1378 = vmatprep.subr.bf16.mxu0 %v1257
    %1379 = vmatpush1.bf16.msra.mxu0 %v1256
    %1380 = vmatprep.subr.bf16.mxu0 %v1255
    %1381 = vmatpush1.bf16.msra.mxu0 %v1254
    %1382 = vmatprep.subr.bf16.mxu0 %v1253
    %1383 = vmatpush1.bf16.msra.mxu0 %v1252
    %1384 = vmatprep.subr.bf16.mxu0 %v1251
    %1385 = vmatpush1.bf16.msra.mxu0 %v1250
    %1386 = vmatprep.subr.bf16.mxu0 %v1249
    %1387 = vmatpush1.bf16.msra.mxu0 %v1248
    %1388 = vmatprep.subr.bf16.mxu0 %v1247
    %1389 = vmatpush1.bf16.msra.mxu0 %v1246
    %1390 = vmatprep.subr.bf16.mxu0 %v1277
    %1391 = vmatpush2.bf16.msra.mxu0 %v1276
    %1392 = vmatprep.subr.bf16.mxu0 %v1275
    %1393 = vmatpush2.bf16.msra.mxu0 %v1274
    %1394 = vmatprep.subr.bf16.mxu0 %v1273
    %1395 = vmatpush2.bf16.msra.mxu0 %v1272
    %1396 = vmatprep.subr.bf16.mxu0 %v1271
    %1397 = vmatpush2.bf16.msra.mxu0 %v1270
    %1398 = vmatprep.subr.bf16.mxu0 %v1269
    %1399 = vmatpush2.bf16.msra.mxu0 %v1268
    %1400 = vmatprep.subr.bf16.mxu0 %v1267
    %1401 = vmatpush2.bf16.msra.mxu0 %v1266
    %1402 = vmatprep.subr.bf16.mxu0 %v1265
    %1403 = vmatpush2.bf16.msra.mxu0 %v1264
    %1404 = vmatprep.subr.bf16.mxu0 %v1263
    %1405 = vmatpush2.bf16.msra.mxu0 %v1262
    %1406 = vmatprep.mubr.bf16.mxu0 %v1040
    %1407 = vmatmul.mubr.bf16.gmra.mxu0 %v1039
    %v1408 = vpop.f32.mrf.mxu0
    %v1409 = vadd.f32 %v1047, %v1408
    %v1410 = vpop.f32.mrf.mxu0
    %v1411 = vadd.f32 %v1051, %v1410
    %v1412 = vpop.f32.mrf.mxu0
    %v1413 = vadd.f32 %v1047, %v1412
    %v1414 = vpop.f32.mrf.mxu0
    %v1415 = vadd.f32 %v1051, %v1414
    %1416 = vdwg.mxu0
    %1417 = vmatprep.subr.bf16.mxu0 %v1293
    %1418 = vmatpush1.bf16.msra.mxu0 %v1292
    %1419 = vmatprep.subr.bf16.mxu0 %v1291
    %1420 = vmatpush1.bf16.msra.mxu0 %v1290
    %1421 = vmatprep.subr.bf16.mxu0 %v1289
    %1422 = vmatpush1.bf16.msra.mxu0 %v1288
    %1423 = vmatprep.subr.bf16.mxu0 %v1287
    %1424 = vmatpush1.bf16.msra.mxu0 %v1286
    %1425 = vmatprep.subr.bf16.mxu0 %v1285
    %1426 = vmatpush1.bf16.msra.mxu0 %v1284
    %1427 = vmatprep.subr.bf16.mxu0 %v1283
    %1428 = vmatpush1.bf16.msra.mxu0 %v1282
    %1429 = vmatprep.subr.bf16.mxu0 %v1281
    %1430 = vmatpush1.bf16.msra.mxu0 %v1280
    %1431 = vmatprep.subr.bf16.mxu0 %v1279
    %1432 = vmatpush1.bf16.msra.mxu0 %v1278
    %1433 = vmatprep.subr.bf16.mxu0 %v1309
    %1434 = vmatpush2.bf16.msra.mxu0 %v1308
    %1435 = vmatprep.subr.bf16.mxu0 %v1307
    %1436 = vmatpush2.bf16.msra.mxu0 %v1306
    %1437 = vmatprep.subr.bf16.mxu0 %v1305
    %1438 = vmatpush2.bf16.msra.mxu0 %v1304
    %1439 = vmatprep.subr.bf16.mxu0 %v1303
    %1440 = vmatpush2.bf16.msra.mxu0 %v1302
    %1441 = vmatprep.subr.bf16.mxu0 %v1301
    %1442 = vmatpush2.bf16.msra.mxu0 %v1300
    %1443 = vmatprep.subr.bf16.mxu0 %v1299
    %1444 = vmatpush2.bf16.msra.mxu0 %v1298
    %1445 = vmatprep.subr.bf16.mxu0 %v1297
    %1446 = vmatpush2.bf16.msra.mxu0 %v1296
    %1447 = vmatprep.subr.bf16.mxu0 %v1295
    %1448 = vmatpush2.bf16.msra.mxu0 %v1294
    %1449 = vmatprep.mubr.bf16.mxu0 %v1042
    %1450 = vmatmul.mubr.bf16.gmra.mxu0 %v1041
    %v1451 = vpop.f32.mrf.mxu0
    %v1452 = vadd.f32 %v1409, %v1451
    %v1453 = vpop.f32.mrf.mxu0
    %v1454 = vadd.f32 %v1411, %v1453
    %v1455 = vpop.f32.mrf.mxu0
    %v1456 = vadd.f32 %v1413, %v1455
    %v1457 = vpop.f32.mrf.mxu0
    %v1458 = vadd.f32 %v1415, %v1457
    %1459 = vdwg.mxu0
    %v1460 = vmax.f32 %v1452, 0.0
    %v1461 = vmax.f32 %v1454, 0.0
    %v1462 = vmax.f32 %v1456, 0.0
    %v1463 = vmax.f32 %v1458, 0.0
    %v1464 = vld [vmem:[%s12 + $0x5] sm:$0x1]
    %v1465 = vpack.c.bf16 %v1462, %v1460
    %v1466 = vpack.c.bf16 %v1463, %v1461
    %v1468 = vlaneseq
    %v1469 = vshrl.u32 %v1468, 7
    %v1470 = vsub.s32 0, %v1469
    %v1471 = vrot.slane %v1464, %v1470
    %v1505 = vunpack.c.l.b16 %v328
    %v1506 = vunpack.c.l.b16 %v329
    %v1507 = vunpack.c.l.b16 %v330
    %v1508 = vunpack.c.l.b16 %v331
    %v1509 = vunpack.c.l.b16 %v332
    %v1510 = vunpack.c.l.b16 %v333
    %v1511 = vunpack.c.l.b16 %v334
    %v1512 = vunpack.c.l.b16 %v335
    %v1513 = vunpack.c.l.b16 %v336
    %v1514 = vunpack.c.l.b16 %v337
    %v1515 = vunpack.c.l.b16 %v338
    %v1516 = vunpack.c.l.b16 %v339
    %v1517 = vunpack.c.l.b16 %v340
    %v1518 = vunpack.c.l.b16 %v341
    %v1519 = vunpack.c.l.b16 %v342
    %v1520 = vunpack.c.l.b16 %v343
    %v1521 = vunpack.c.l.b16 %v344
    %v1522 = vunpack.c.l.b16 %v345
    %v1523 = vunpack.c.l.b16 %v346
    %v1524 = vunpack.c.l.b16 %v347
    %v1525 = vunpack.c.l.b16 %v348
    %v1526 = vunpack.c.l.b16 %v349
    %v1527 = vunpack.c.l.b16 %v350
    %v1528 = vunpack.c.l.b16 %v351
    %v1529 = vunpack.c.l.b16 %v352
    %v1530 = vunpack.c.l.b16 %v353
    %v1531 = vunpack.c.l.b16 %v354
    %v1532 = vunpack.c.l.b16 %v355
    %v1533 = vunpack.c.l.b16 %v356
    %v1534 = vunpack.c.l.b16 %v357
    %v1535 = vunpack.c.l.b16 %v358
    %v1536 = vunpack.c.l.b16 %v359
    %v1537 = vpack.c.b16 %v1506, %v1505
    %v1538 = vpack.c.b16 %v1508, %v1507
    %v1539 = vpack.c.b16 %v1510, %v1509
    %v1540 = vpack.c.b16 %v1512, %v1511
    %v1541 = vpack.c.b16 %v1514, %v1513
    %v1542 = vpack.c.b16 %v1516, %v1515
    %v1543 = vpack.c.b16 %v1518, %v1517
    %v1544 = vpack.c.b16 %v1520, %v1519
    %v1545 = vpack.c.b16 %v1522, %v1521
    %v1546 = vpack.c.b16 %v1524, %v1523
    %v1547 = vpack.c.b16 %v1526, %v1525
    %v1548 = vpack.c.b16 %v1528, %v1527
    %v1549 = vpack.c.b16 %v1530, %v1529
    %v1550 = vpack.c.b16 %v1532, %v1531
    %v1551 = vpack.c.b16 %v1534, %v1533
    %v1552 = vpack.c.b16 %v1536, %v1535
    %1569 = vmatprep.subr.bf16.mxu0 0
    %1570 = vmatpush1.bf16.msra.mxu0 %v1544
    %1571 = vmatprep.subr.bf16.mxu0 0
    %1572 = vmatpush1.bf16.msra.mxu0 %v1543
    %1573 = vmatprep.subr.bf16.mxu0 0
    %1574 = vmatpush1.bf16.msra.mxu0 %v1542
    %1575 = vmatprep.subr.bf16.mxu0 0
    %1576 = vmatpush1.bf16.msra.mxu0 %v1541
    %1577 = vmatprep.subr.bf16.mxu0 0
    %1578 = vmatpush1.bf16.msra.mxu0 %v1540
    %1579 = vmatprep.subr.bf16.mxu0 0
    %1580 = vmatpush1.bf16.msra.mxu0 %v1539
    %1581 = vmatprep.subr.bf16.mxu0 0
    %1582 = vmatpush1.bf16.msra.mxu0 %v1538
    %1583 = vmatprep.subr.bf16.mxu0 0
    %1584 = vmatpush1.bf16.msra.mxu0 %v1537
    %1585 = vmatprep.subr.bf16.mxu0 0
    %1586 = vmatpush2.bf16.msra.mxu0 %v1552
    %1587 = vmatprep.subr.bf16.mxu0 0
    %1588 = vmatpush2.bf16.msra.mxu0 %v1551
    %1589 = vmatprep.subr.bf16.mxu0 0
    %1590 = vmatpush2.bf16.msra.mxu0 %v1550
    %1591 = vmatprep.subr.bf16.mxu0 0
    %1592 = vmatpush2.bf16.msra.mxu0 %v1549
    %1593 = vmatprep.subr.bf16.mxu0 0
    %1594 = vmatpush2.bf16.msra.mxu0 %v1548
    %1595 = vmatprep.subr.bf16.mxu0 0
    %1596 = vmatpush2.bf16.msra.mxu0 %v1547
    %1597 = vmatprep.subr.bf16.mxu0 0
    %1598 = vmatpush2.bf16.msra.mxu0 %v1546
    %1599 = vmatprep.subr.bf16.mxu0 0
    %1600 = vmatpush2.bf16.msra.mxu0 %v1545
    %1601 = vmatprep.mubr.bf16.mxu0 %v1466
    %1602 = vmatmul.mubr.bf16.gmra.mxu0 %v1465
    %v1603 = vpop.f32.mrf.mxu0
    %v1604 = vadd.f32 %v1471, %v1603
    %v1605 = vpop.f32.mrf.mxu0
    %v1606 = vpop.f32.mrf.mxu0
    %v1607 = vadd.f32 %v1471, %v1606
    %v1608 = vpop.f32.mrf.mxu0
    %1609 = vdwg.mxu0
    %v1610 = vmax.f32 %v1604, 0.0
    %v1611 = vmax.f32 %v1607, 0.0
    %v1612 = vld [vmem:[%s12 + $0x6] sm:$0x1]
    %v1613 = vpack.c.bf16 %v1037, %v1036
    %v1615 = vlaneseq
    %v1616 = vshrl.u32 %v1615, 7
    %v1617 = vsub.s32 0, %v1616
    %v1618 = vrot.slane %v1612, %v1617
    %v1636 = vunpack.c.l.b16 %v360
    %v1637 = vunpack.c.l.b16 %v361
    %v1638 = vunpack.c.l.b16 %v362
    %v1639 = vunpack.c.l.b16 %v363
    %v1640 = vunpack.c.l.b16 %v364
    %v1641 = vunpack.c.l.b16 %v365
    %v1642 = vunpack.c.l.b16 %v366
    %v1643 = vunpack.c.l.b16 %v367
    %v1644 = vunpack.c.l.b16 %v368
    %v1645 = vunpack.c.l.b16 %v369
    %v1646 = vunpack.c.l.b16 %v370
    %v1647 = vunpack.c.l.b16 %v371
    %v1648 = vunpack.c.l.b16 %v372
    %v1649 = vunpack.c.l.b16 %v373
    %v1650 = vunpack.c.l.b16 %v374
    %v1651 = vunpack.c.l.b16 %v375
    %v1652 = vpack.c.b16 %v1637, %v1636
    %v1653 = vpack.c.b16 %v1639, %v1638
    %v1654 = vpack.c.b16 %v1641, %v1640
    %v1655 = vpack.c.b16 %v1643, %v1642
    %v1656 = vpack.c.b16 %v1645, %v1644
    %v1657 = vpack.c.b16 %v1647, %v1646
    %v1658 = vpack.c.b16 %v1649, %v1648
    %v1659 = vpack.c.b16 %v1651, %v1650
    %1668 = vmatprep.subr.bf16.mxu0 0
    %1669 = vmatpush1.bf16.msra.mxu0 %v1659
    %1670 = vmatprep.subr.bf16.mxu0 0
    %1671 = vmatpush1.bf16.msra.mxu0 %v1658
    %1672 = vmatprep.subr.bf16.mxu0 0
    %1673 = vmatpush1.bf16.msra.mxu0 %v1657
    %1674 = vmatprep.subr.bf16.mxu0 0
    %1675 = vmatpush1.bf16.msra.mxu0 %v1656
    %1676 = vmatprep.subr.bf16.mxu0 0
    %1677 = vmatpush1.bf16.msra.mxu0 %v1655
    %1678 = vmatprep.subr.bf16.mxu0 0
    %1679 = vmatpush1.bf16.msra.mxu0 %v1654
    %1680 = vmatprep.subr.bf16.mxu0 0
    %1681 = vmatpush1.bf16.msra.mxu0 %v1653
    %1682 = vmatprep.subr.bf16.mxu0 0
    %1683 = vmatpush1.bf16.msra.mxu0 %v1652
    %1684 = vmatprep.subr.bf16.mxu0 0
    %1685 = vmatpush2.bf16.msra.mxu0 0
    %1686 = vmatprep.subr.bf16.mxu0 0
    %1687 = vmatpush2.bf16.msra.mxu0 0
    %1688 = vmatprep.subr.bf16.mxu0 0
    %1689 = vmatpush2.bf16.msra.mxu0 0
    %1690 = vmatprep.subr.bf16.mxu0 0
    %1691 = vmatpush2.bf16.msra.mxu0 0
    %1692 = vmatprep.subr.bf16.mxu0 0
    %1693 = vmatpush2.bf16.msra.mxu0 0
    %1694 = vmatprep.subr.bf16.mxu0 0
    %1695 = vmatpush2.bf16.msra.mxu0 0
    %1696 = vmatprep.subr.bf16.mxu0 0
    %1697 = vmatpush2.bf16.msra.mxu0 0
    %1698 = vmatprep.subr.bf16.mxu0 0
    %1699 = vmatpush2.bf16.msra.mxu0 0
    %1700 = vmatprep.mubr.bf16.mxu0 0
    %1701 = vmatmul.mubr.bf16.gmra.mxu0 %v1613
    %v1702 = vpop.f32.mrf.mxu0
    %v1703 = vadd.f32 %v1618, %v1702
    %v1704 = vpop.f32.mrf.mxu0
    %v1705 = vpop.f32.mrf.mxu0
    %v1706 = vadd.f32 %v1618, %v1705
    %v1707 = vpop.f32.mrf.mxu0
    %1708 = vdwg.mxu0
    %v1709 = vmax.f32 %v1703, 0.0
    %v1710 = vmax.f32 %v1706, 0.0
    %v1711 = vld [vmem:[%s12 + $0x7] sm:$0x1]
    %v1712 = vpack.c.bf16 %v1611, %v1610
    %v1714 = vlaneseq
    %v1715 = vshrl.u32 %v1714, 7
    %v1716 = vsub.s32 0, %v1715
    %v1717 = vrot.slane %v1711, %v1716
    %v1735 = vunpack.c.l.b16 %v376
    %v1736 = vunpack.c.l.b16 %v377
    %v1737 = vunpack.c.l.b16 %v378
    %v1738 = vunpack.c.l.b16 %v379
    %v1739 = vunpack.c.l.b16 %v380
    %v1740 = vunpack.c.l.b16 %v381
    %v1741 = vunpack.c.l.b16 %v382
    %v1742 = vunpack.c.l.b16 %v383
    %v1743 = vunpack.c.l.b16 %v384
    %v1744 = vunpack.c.l.b16 %v385
    %v1745 = vunpack.c.l.b16 %v386
    %v1746 = vunpack.c.l.b16 %v387
    %v1747 = vunpack.c.l.b16 %v388
    %v1748 = vunpack.c.l.b16 %v389
    %v1749 = vunpack.c.l.b16 %v390
    %v1750 = vunpack.c.l.b16 %v391
    %v1751 = vpack.c.b16 %v1736, %v1735
    %v1752 = vpack.c.b16 %v1738, %v1737
    %v1753 = vpack.c.b16 %v1740, %v1739
    %v1754 = vpack.c.b16 %v1742, %v1741
    %v1755 = vpack.c.b16 %v1744, %v1743
    %v1756 = vpack.c.b16 %v1746, %v1745
    %v1757 = vpack.c.b16 %v1748, %v1747
    %v1758 = vpack.c.b16 %v1750, %v1749
    %1767 = vmatprep.subr.bf16.mxu0 0
    %1768 = vmatpush1.bf16.msra.mxu0 %v1758
    %1769 = vmatprep.subr.bf16.mxu0 0
    %1770 = vmatpush1.bf16.msra.mxu0 %v1757
    %1771 = vmatprep.subr.bf16.mxu0 0
    %1772 = vmatpush1.bf16.msra.mxu0 %v1756
    %1773 = vmatprep.subr.bf16.mxu0 0
    %1774 = vmatpush1.bf16.msra.mxu0 %v1755
    %1775 = vmatprep.subr.bf16.mxu0 0
    %1776 = vmatpush1.bf16.msra.mxu0 %v1754
    %1777 = vmatprep.subr.bf16.mxu0 0
    %1778 = vmatpush1.bf16.msra.mxu0 %v1753
    %1779 = vmatprep.subr.bf16.mxu0 0
    %1780 = vmatpush1.bf16.msra.mxu0 %v1752
    %1781 = vmatprep.subr.bf16.mxu0 0
    %1782 = vmatpush1.bf16.msra.mxu0 %v1751
    %1783 = vmatprep.subr.bf16.mxu0 0
    %1784 = vmatpush2.bf16.msra.mxu0 0
    %1785 = vmatprep.subr.bf16.mxu0 0
    %1786 = vmatpush2.bf16.msra.mxu0 0
    %1787 = vmatprep.subr.bf16.mxu0 0
    %1788 = vmatpush2.bf16.msra.mxu0 0
    %1789 = vmatprep.subr.bf16.mxu0 0
    %1790 = vmatpush2.bf16.msra.mxu0 0
    %1791 = vmatprep.subr.bf16.mxu0 0
    %1792 = vmatpush2.bf16.msra.mxu0 0
    %1793 = vmatprep.subr.bf16.mxu0 0
    %1794 = vmatpush2.bf16.msra.mxu0 0
    %1795 = vmatprep.subr.bf16.mxu0 0
    %1796 = vmatpush2.bf16.msra.mxu0 0
    %1797 = vmatprep.subr.bf16.mxu0 0
    %1798 = vmatpush2.bf16.msra.mxu0 0
    %1799 = vmatprep.mubr.bf16.mxu0 0
    %1800 = vmatmul.mubr.bf16.gmra.mxu0 %v1712
    %v1801 = vpop.f32.mrf.mxu0
    %v1802 = vadd.f32 %v1717, %v1801
    %v1803 = vpop.f32.mrf.mxu0
    %v1804 = vpop.f32.mrf.mxu0
    %v1805 = vadd.f32 %v1717, %v1804
    %v1806 = vpop.f32.mrf.mxu0
    %1807 = vdwg.mxu0
    %v1808 = vmax.f32 %v1802, 0.0
    %v1809 = vmax.f32 %v1805, 0.0
    %v1810 = vpack.c.bf16 %v1710, %v1709
    %v1811 = vpack.c.bf16 %v1809, %v1808
    %v1828 = vunpack.c.l.b16 %v408
    %v1829 = vunpack.c.l.b16 %v409
    %v1830 = vunpack.c.l.b16 %v410
    %v1831 = vunpack.c.l.b16 %v411
    %v1832 = vunpack.c.l.b16 %v412
    %v1833 = vunpack.c.l.b16 %v413
    %v1834 = vunpack.c.l.b16 %v414
    %v1835 = vunpack.c.l.b16 %v415
    %v1836 = vunpack.c.l.b16 %v416
    %v1837 = vunpack.c.l.b16 %v417
    %v1838 = vunpack.c.l.b16 %v418
    %v1839 = vunpack.c.l.b16 %v419
    %v1840 = vunpack.c.l.b16 %v420
    %v1841 = vunpack.c.l.b16 %v421
    %v1842 = vunpack.c.l.b16 %v422
    %v1843 = vunpack.c.l.b16 %v423
    %v1844 = vpack.c.b16 %v1829, %v1828
    %v1845 = vpack.c.b16 %v1831, %v1830
    %v1846 = vpack.c.b16 %v1833, %v1832
    %v1847 = vpack.c.b16 %v1835, %v1834
    %v1848 = vpack.c.b16 %v1837, %v1836
    %v1849 = vpack.c.b16 %v1839, %v1838
    %v1850 = vpack.c.b16 %v1841, %v1840
    %v1851 = vpack.c.b16 %v1843, %v1842
    %1860 = vmatprep.subr.bf16.mxu0 0
    %1861 = vmatpush1.bf16.msra.mxu0 %v1851
    %1862 = vmatprep.subr.bf16.mxu0 0
    %1863 = vmatpush1.bf16.msra.mxu0 %v1850
    %1864 = vmatprep.subr.bf16.mxu0 0
    %1865 = vmatpush1.bf16.msra.mxu0 %v1849
    %1866 = vmatprep.subr.bf16.mxu0 0
    %1867 = vmatpush1.bf16.msra.mxu0 %v1848
    %1868 = vmatprep.subr.bf16.mxu0 0
    %1869 = vmatpush1.bf16.msra.mxu0 %v1847
    %1870 = vmatprep.subr.bf16.mxu0 0
    %1871 = vmatpush1.bf16.msra.mxu0 %v1846
    %1872 = vmatprep.subr.bf16.mxu0 0
    %1873 = vmatpush1.bf16.msra.mxu0 %v1845
    %1874 = vmatprep.subr.bf16.mxu0 0
    %1875 = vmatpush1.bf16.msra.mxu0 %v1844
    %1876 = vmatprep.subr.bf16.mxu0 0
    %1877 = vmatpush2.bf16.msra.mxu0 0
    %1878 = vmatprep.subr.bf16.mxu0 0
    %1879 = vmatpush2.bf16.msra.mxu0 0
    %1880 = vmatprep.subr.bf16.mxu0 0
    %1881 = vmatpush2.bf16.msra.mxu0 0
    %1882 = vmatprep.subr.bf16.mxu0 0
    %1883 = vmatpush2.bf16.msra.mxu0 0
    %1884 = vmatprep.subr.bf16.mxu0 0
    %1885 = vmatpush2.bf16.msra.mxu0 0
    %1886 = vmatprep.subr.bf16.mxu0 0
    %1887 = vmatpush2.bf16.msra.mxu0 0
    %1888 = vmatprep.subr.bf16.mxu0 0
    %1889 = vmatpush2.bf16.msra.mxu0 0
    %1890 = vmatprep.subr.bf16.mxu0 0
    %1891 = vmatpush2.bf16.msra.mxu0 0
    %1892 = vmatprep.mubr.bf16.mxu0 0
    %1893 = vmatmul.mubr.bf16.gmra.mxu0 %v1811
    %v1894 = vpop.f32.mrf.mxu0
    %v1895 = vadd.f32 0.0, %v1894
    %v1896 = vpop.f32.mrf.mxu0
    %v1897 = vpop.f32.mrf.mxu0
    %v1898 = vadd.f32 0.0, %v1897
    %v1899 = vpop.f32.mrf.mxu0
    %1900 = vdwg.mxu0
    %v1917 = vunpack.c.l.b16 %v392
    %v1918 = vunpack.c.l.b16 %v393
    %v1919 = vunpack.c.l.b16 %v394
    %v1920 = vunpack.c.l.b16 %v395
    %v1921 = vunpack.c.l.b16 %v396
    %v1922 = vunpack.c.l.b16 %v397
    %v1923 = vunpack.c.l.b16 %v398
    %v1924 = vunpack.c.l.b16 %v399
    %v1925 = vunpack.c.l.b16 %v400
    %v1926 = vunpack.c.l.b16 %v401
    %v1927 = vunpack.c.l.b16 %v402
    %v1928 = vunpack.c.l.b16 %v403
    %v1929 = vunpack.c.l.b16 %v404
    %v1930 = vunpack.c.l.b16 %v405
    %v1931 = vunpack.c.l.b16 %v406
    %v1932 = vunpack.c.l.b16 %v407
    %v1933 = vpack.c.b16 %v1918, %v1917
    %v1934 = vpack.c.b16 %v1920, %v1919
    %v1935 = vpack.c.b16 %v1922, %v1921
    %v1936 = vpack.c.b16 %v1924, %v1923
    %v1937 = vpack.c.b16 %v1926, %v1925
    %v1938 = vpack.c.b16 %v1928, %v1927
    %v1939 = vpack.c.b16 %v1930, %v1929
    %v1940 = vpack.c.b16 %v1932, %v1931
    %1949 = vmatprep.subr.bf16.mxu0 0
    %1950 = vmatpush1.bf16.msra.mxu0 %v1940
    %1951 = vmatprep.subr.bf16.mxu0 0
    %1952 = vmatpush1.bf16.msra.mxu0 %v1939
    %1953 = vmatprep.subr.bf16.mxu0 0
    %1954 = vmatpush1.bf16.msra.mxu0 %v1938
    %1955 = vmatprep.subr.bf16.mxu0 0
    %1956 = vmatpush1.bf16.msra.mxu0 %v1937
    %1957 = vmatprep.subr.bf16.mxu0 0
    %1958 = vmatpush1.bf16.msra.mxu0 %v1936
    %1959 = vmatprep.subr.bf16.mxu0 0
    %1960 = vmatpush1.bf16.msra.mxu0 %v1935
    %1961 = vmatprep.subr.bf16.mxu0 0
    %1962 = vmatpush1.bf16.msra.mxu0 %v1934
    %1963 = vmatprep.subr.bf16.mxu0 0
    %1964 = vmatpush1.bf16.msra.mxu0 %v1933
    %1965 = vmatprep.subr.bf16.mxu0 0
    %1966 = vmatpush2.bf16.msra.mxu0 0
    %1967 = vmatprep.subr.bf16.mxu0 0
    %1968 = vmatpush2.bf16.msra.mxu0 0
    %1969 = vmatprep.subr.bf16.mxu0 0
    %1970 = vmatpush2.bf16.msra.mxu0 0
    %1971 = vmatprep.subr.bf16.mxu0 0
    %1972 = vmatpush2.bf16.msra.mxu0 0
    %1973 = vmatprep.subr.bf16.mxu0 0
    %1974 = vmatpush2.bf16.msra.mxu0 0
    %1975 = vmatprep.subr.bf16.mxu0 0
    %1976 = vmatpush2.bf16.msra.mxu0 0
    %1977 = vmatprep.subr.bf16.mxu0 0
    %1978 = vmatpush2.bf16.msra.mxu0 0
    %1979 = vmatprep.subr.bf16.mxu0 0
    %1980 = vmatpush2.bf16.msra.mxu0 0
    %1981 = vmatprep.mubr.bf16.mxu0 0
    %1982 = vmatmul.mubr.bf16.gmra.mxu0 %v1810
    %v1983 = vpop.f32.mrf.mxu0
    %v1984 = vadd.f32 %v1895, %v1983
    %v1985 = vpop.f32.mrf.mxu0
    %v1986 = vpop.f32.mrf.mxu0
    %v1987 = vadd.f32 %v1898, %v1986
    %v1988 = vpop.f32.mrf.mxu0
    %1989 = vdwg.mxu0
    %v1990 = vld [vmem:[%s12 + $0x8] sm:$0x1]
    %v1992 = vlaneseq
    %v1993 = vshrl.u32 %v1992, 7
    %v1994 = vsub.s32 0, %v1993
    %v1995 = vrot.slane %v1990, %v1994
    %v1997 = vadd.f32 %v1984, %v1995
    %v1998 = vadd.f32 %v1987, %v1995
    %v1999 = vmax.f32 %v1997, 0.0
    %v2000 = vmax.f32 %v1998, 0.0
    %v2001 = vld [vmem:[%s12 + $0x9] sm:$0x1]
    %v2002 = vpack.c.bf16 %v2000, %v1999
    %v2004 = vlaneseq
    %v2005 = vshrl.u32 %v2004, 7
    %v2006 = vsub.s32 0, %v2005
    %v2007 = vrot.slane %v2001, %v2006
    %v2025 = vunpack.c.l.b16 %v424
    %v2026 = vunpack.c.l.b16 %v425
    %v2027 = vunpack.c.l.b16 %v426
    %v2028 = vunpack.c.l.b16 %v427
    %v2029 = vunpack.c.l.b16 %v428
    %v2030 = vunpack.c.l.b16 %v429
    %v2031 = vunpack.c.l.b16 %v430
    %v2032 = vunpack.c.l.b16 %v431
    %v2033 = vunpack.c.l.b16 %v432
    %v2034 = vunpack.c.l.b16 %v433
    %v2035 = vunpack.c.l.b16 %v434
    %v2036 = vunpack.c.l.b16 %v435
    %v2037 = vunpack.c.l.b16 %v436
    %v2038 = vunpack.c.l.b16 %v437
    %v2039 = vunpack.c.l.b16 %v438
    %v2040 = vunpack.c.l.b16 %v439
    %v2041 = vpack.c.b16 %v2026, %v2025
    %v2042 = vpack.c.b16 %v2028, %v2027
    %v2043 = vpack.c.b16 %v2030, %v2029
    %v2044 = vpack.c.b16 %v2032, %v2031
    %v2045 = vpack.c.b16 %v2034, %v2033
    %v2046 = vpack.c.b16 %v2036, %v2035
    %v2047 = vpack.c.b16 %v2038, %v2037
    %v2048 = vpack.c.b16 %v2040, %v2039
    %2057 = vmatprep.subr.bf16.mxu0 0
    %2058 = vmatpush1.bf16.msra.mxu0 %v2048
    %2059 = vmatprep.subr.bf16.mxu0 0
    %2060 = vmatpush1.bf16.msra.mxu0 %v2047
    %2061 = vmatprep.subr.bf16.mxu0 0
    %2062 = vmatpush1.bf16.msra.mxu0 %v2046
    %2063 = vmatprep.subr.bf16.mxu0 0
    %2064 = vmatpush1.bf16.msra.mxu0 %v2045
    %2065 = vmatprep.subr.bf16.mxu0 0
    %2066 = vmatpush1.bf16.msra.mxu0 %v2044
    %2067 = vmatprep.subr.bf16.mxu0 0
    %2068 = vmatpush1.bf16.msra.mxu0 %v2043
    %2069 = vmatprep.subr.bf16.mxu0 0
    %2070 = vmatpush1.bf16.msra.mxu0 %v2042
    %2071 = vmatprep.subr.bf16.mxu0 0
    %2072 = vmatpush1.bf16.msra.mxu0 %v2041
    %2073 = vmatprep.subr.bf16.mxu0 0
    %2074 = vmatpush2.bf16.msra.mxu0 0
    %2075 = vmatprep.subr.bf16.mxu0 0
    %2076 = vmatpush2.bf16.msra.mxu0 0
    %2077 = vmatprep.subr.bf16.mxu0 0
    %2078 = vmatpush2.bf16.msra.mxu0 0
    %2079 = vmatprep.subr.bf16.mxu0 0
    %2080 = vmatpush2.bf16.msra.mxu0 0
    %2081 = vmatprep.subr.bf16.mxu0 0
    %2082 = vmatpush2.bf16.msra.mxu0 0
    %2083 = vmatprep.subr.bf16.mxu0 0
    %2084 = vmatpush2.bf16.msra.mxu0 0
    %2085 = vmatprep.subr.bf16.mxu0 0
    %2086 = vmatpush2.bf16.msra.mxu0 0
    %2087 = vmatprep.subr.bf16.mxu0 0
    %2088 = vmatpush2.bf16.msra.mxu0 0
    %2089 = vmatprep.mubr.bf16.mxu0 0
    %2090 = vmatmul.mubr.bf16.gmra.mxu0 %v2002
    %v2091 = vpop.f32.mrf.mxu0
    %v2092 = vadd.f32 %v2007, %v2091
    %v2093 = vpop.f32.mrf.mxu0
    %v2094 = vpop.f32.mrf.mxu0
    %v2095 = vadd.f32 %v2007, %v2094
    %v2096 = vpop.f32.mrf.mxu0
    %2097 = vdwg.mxu0
    %v2098 = vmax.f32 %v2092, 0.0
    %v2099 = vmax.f32 %v2095, 0.0
    %v2100 = vpack.c.bf16 %v2099, %v2098
    %v2101 = vld [vmem:[%s12 + $0xa] sm:$0x1]
    %v2103 = vlaneseq
    %v2104 = vshrl.u32 %v2103, 7
    %v2105 = vsub.s32 0, %v2104
    %v2106 = vrot.slane %v2101, %v2105
    %v2116 = vunpack.c.l.b16 %v440
    %v2117 = vunpack.c.l.b16 %v441
    %v2118 = vunpack.c.l.b16 %v442
    %v2119 = vunpack.c.l.b16 %v443
    %v2120 = vunpack.c.l.b16 %v444
    %v2121 = vunpack.c.l.b16 %v445
    %v2122 = vunpack.c.l.b16 %v446
    %v2123 = vunpack.c.l.b16 %v447
    %v2124 = vpack.c.b16 %v2117, %v2116
    %v2125 = vpack.c.b16 %v2119, %v2118
    %v2126 = vpack.c.b16 %v2121, %v2120
    %v2127 = vpack.c.b16 %v2123, %v2122
    %vm2132 = vcmask 523264
    %v2134 = vsel %vm2132, %v2100, 0
    %2136 = vmatprep.subr.bf16.mxu0 0
    %2137 = vmatpush1.bf16.msra.mxu0 0
    %2138 = vmatprep.subr.bf16.mxu0 0
    %2139 = vmatpush1.bf16.msra.mxu0 0
    %2140 = vmatprep.subr.bf16.mxu0 0
    %2141 = vmatpush1.bf16.msra.mxu0 0
    %2142 = vmatprep.subr.bf16.mxu0 0
    %2143 = vmatpush1.bf16.msra.mxu0 0
    %2144 = vmatprep.subr.bf16.mxu0 0
    %2145 = vmatpush1.bf16.msra.mxu0 %v2127
    %2146 = vmatprep.subr.bf16.mxu0 0
    %2147 = vmatpush1.bf16.msra.mxu0 %v2126
    %2148 = vmatprep.subr.bf16.mxu0 0
    %2149 = vmatpush1.bf16.msra.mxu0 %v2125
    %2150 = vmatprep.subr.bf16.mxu0 0
    %2151 = vmatpush1.bf16.msra.mxu0 %v2124
    %2152 = vmatprep.subr.bf16.mxu0 0
    %2153 = vmatpush2.bf16.msra.mxu0 0
    %2154 = vmatprep.subr.bf16.mxu0 0
    %2155 = vmatpush2.bf16.msra.mxu0 0
    %2156 = vmatprep.subr.bf16.mxu0 0
    %2157 = vmatpush2.bf16.msra.mxu0 0
    %2158 = vmatprep.subr.bf16.mxu0 0
    %2159 = vmatpush2.bf16.msra.mxu0 0
    %2160 = vmatprep.subr.bf16.mxu0 0
    %2161 = vmatpush2.bf16.msra.mxu0 0
    %2162 = vmatprep.subr.bf16.mxu0 0
    %2163 = vmatpush2.bf16.msra.mxu0 0
    %2164 = vmatprep.subr.bf16.mxu0 0
    %2165 = vmatpush2.bf16.msra.mxu0 0
    %2166 = vmatprep.subr.bf16.mxu0 0
    %2167 = vmatpush2.bf16.msra.mxu0 0
    %2168 = vmatprep.mubr.bf16.mxu0 0
    %2169 = vmatmul.mubr.bf16.gmra.mxu0 %v2134
    %v2170 = vpop.f32.mrf.mxu0
    %v2171 = vadd.f32 %v2106, %v2170
    %v2172 = vpop.f32.mrf.mxu0
    %v2173 = vpop.f32.mrf.mxu0
    %v2174 = vadd.f32 %v2106, %v2173
    %v2175 = vpop.f32.mrf.mxu0
    %2176 = vdwg.mxu0
    %v2178 = vunpack.c.l.b16 %v2002
    %v2179 = vunpack.c.h.b16 %v2002
    %v2180 = vpack.c.b16 %v2178, %v2178
    %v2181 = vpack.c.b16 %v2179, %v2179
    %2184 = vst [vmem:[#allocation17] sm:$0xf] %v2180
    %2185 = vst [vmem:[#allocation17 + $0x8] sm:$0xf] %v2181
    %v2186 = vpack.c.bf16 %v2174, %v2171
    %v2188 = vunpack.c.l.b16 %v2186
    %v2189 = vunpack.c.h.b16 %v2186
    %v2190 = vpack.c.b16 %v2188, %v2188
    %v2191 = vpack.c.b16 %v2189, %v2189
    %2194 = vst [vmem:[#allocation17 + $0x4] sm:$0xf] %v2190
    %2195 = vst [vmem:[#allocation17 + $0xc] sm:$0xf] %v2191
    // Predicated region
    $region90: #{tpu_custom_call.1} parent=1 // pred_check
      _
    $region91: #{tpu_custom_call.1} parent=1 // pred_check_branch
      %2197 = sbr.rel (0) target = $region93
    $region92: #{tpu_custom_call.1} parent=1 // pred_region
      %s2199 = ssub.s32 256, 256
      %2200 = vsyncadd [#allocation4], %s2199
      %s2201 = sshll.u32 [#allocation17], 4
      %s2202 = int_to_ptr.vmem [resolvable:$true] %s2201
      %2207 = dma.vmem_to_hbm [thread:$0]  %s2202, 256, %s13, [#allocation4], 128, 128, 8
    $region93: #{tpu_custom_call.1} parent=1 // pred_fallthru
      _
    // Predicated region
    $region94: #{tpu_custom_call.1} parent=1 // pred_check
      _
    $region95: #{tpu_custom_call.1} parent=1 // pred_check_branch
      %2209 = sbr.rel (0) target = $region97
    $region96: #{tpu_custom_call.1} parent=1 // pred_region
      %2210 = dma.done [#allocation4], 256
    $region97: #{tpu_custom_call.1} parent=1 // pred_fallthru
      _
    %2211 = vsyncpa [#allocation3], 1
    %2212 = vsyncpa [#allocation6], 1
    %2213 = vsyncpa [#allocation9], 1
    %2214 = vsyncpa [#allocation12], 1
    %2215 = vsyncpa [#allocation15], 1
    %2216 = vsyncpa [#allocation4], 1

</llo_original>
